<compile_context>
chip_gen: v5e
topology: v5e:2x2
jax: 0.10.0
libtpu: 0.0.40
codegen_flags: <defaults>
</compile_context>

<pallas_src>
import functools

import jax
import jax.numpy as jnp
from jax.experimental import pallas as pl
from jax.experimental.pallas import tpu as pltpu

_LANE = 128
_SUBLANE = 8


def _round_up(x, m):
    return ((x + m - 1) // m) * m


# ----------------------------------------------------------------------------
# Fused kernel: embedding gather + all conv branches + bias + ReLU + max-pool
#               + fc + masked log-softmax              (one grid axis = batch)
# ----------------------------------------------------------------------------
def _textcnn_fused_kernel(ids_ref, emb_ref, wconv_ref, bconv_ref, fscol_ref,
                          wfc_ref, bfc_ref, o_ref, *,
                          seq_len, seq_len_pad, max_fs, labels):
    # ids_ref:   [TB*Lp, 1]          int32  (token ids, flat per batch tile)
    # emb_ref:   [V_pad, E_pad]      bf16   (whole embedding table, zero pad)
    # wconv_ref: [max_fs, E_pad, NF] bf16   (per-tap filter banks, zero pad)
    # bconv_ref: [1, NF]             f32
    # fscol_ref: [1, NF]             int32  (filter size per column, 0 = pad)
    # wfc_ref:   [NF, NL]            bf16   (clipped + padded fc weight)
    # bfc_ref:   [1, NL]             f32
    # o_ref:     [TB, NL]            f32    (log-probs; cols >= labels are pad)
    BL = ids_ref.shape[0]
    V_pad, E_pad = emb_ref.shape
    NF = wconv_ref.shape[2]
    NL = wfc_ref.shape[1]
    Lp = seq_len_pad
    TB = BL // Lp

    # --- fused embedding gather: one-hot [BL,V_pad] @ table [V_pad,E_pad] ---
    # Vocab here is tiny and lane-padded; the one-hot select is exact in bf16.
    # TODO(synk): at large vocab switch to PrefetchScalarGridSpec +
    # pl.Element row gather instead of the one-hot matmul.
    onehot = (jax.lax.broadcasted_iota(jnp.int32, (BL, V_pad), 1)
              == ids_ref[...]).astype(jnp.bfloat16)
    xe = jnp.dot(onehot, emb_ref[...],
                 preferred_element_type=jnp.float32).astype(jnp.bfloat16)

    # --- all conv branches as max_fs shifted-window matmuls (no im2col) ---
    # Row i of the tile is (sequence b, position t); tap s needs row i+s.
    # Shifts that cross a sequence boundary (or land in the zero tail) only
    # reach positions t >= L - fs + 1, which the validity mask below zeroes,
    # or hit zero-padded filter taps, so they never contaminate valid output.
    pad_rows = _round_up(max_fs, 2 * _SUBLANE)
    xe_ext = jnp.concatenate(
        [xe, jnp.zeros((pad_rows, E_pad), jnp.bfloat16)], axis=0)
    y = jnp.zeros((BL, NF), jnp.float32)
    for s in range(max_fs):                       # static unroll, max_fs small
        y = y + jnp.dot(xe_ext[s:s + BL, :], wconv_ref[s],
                        preferred_element_type=jnp.float32)
    y = jnp.maximum(y + bconv_ref[...], 0.0)      # bias + ReLU (f32)

    # --- mask positions past each branch's valid conv length, then max-pool ---
    # ReLU output is >= 0, so 0 is neutral for the max.  No integer modulo:
    # the mask is an iota over the L axis of the (layout-free) 3D view.
    lim = jnp.where(fscol_ref[...] > 0, seq_len - fscol_ref[...] + 1, 0)
    y3 = y.reshape(TB, Lp, NF)                    # layout-free: Lp % 8 == 0
    pos = jax.lax.broadcasted_iota(jnp.int32, (TB, Lp, NF), 1)
    y3 = jnp.where(pos < lim[None], y3, 0.0)
    feats = jnp.max(y3, axis=1)                   # [TB, NF] f32

    # --- fc head (bf16 MXU, f32 accumulate) + masked log-softmax ---
    logits = jnp.dot(feats.astype(wfc_ref.dtype), wfc_ref[...],
                     preferred_element_type=jnp.float32) + bfc_ref[...]
    col = jax.lax.broadcasted_iota(jnp.int32, (TB, NL), 1)
    logits = jnp.where(col < labels, logits, jnp.float32(-1e30))
    m = jnp.max(logits, axis=-1, keepdims=True)
    z = logits - m
    lse = jnp.log(jnp.sum(jnp.exp(z), axis=-1, keepdims=True))
    o_ref[...] = z - lse


def textcnn_fused(ids_col, emb, w_conv, b_conv, fs_col, w_fc, b_fc,
                  *, batch, seq_len, seq_len_pad, labels, max_fs, tile_b):
    assert batch % tile_b == 0, (batch, tile_b)
    V_pad, E_pad = emb.shape
    NF = w_conv.shape[2]
    NL = w_fc.shape[1]
    Lp = seq_len_pad
    n_tiles = batch // tile_b

    kern = functools.partial(_textcnn_fused_kernel, seq_len=seq_len,
                             seq_len_pad=Lp, max_fs=max_fs, labels=labels)

    # Advisory cost estimate so XLA overlaps the (tiny) surrounding ops.
    flops = (2 * batch * Lp * (V_pad * E_pad + max_fs * E_pad * NF)
             + 2 * batch * NF * NL)
    bytes_accessed = (ids_col.size * 4 + emb.size * 2 + w_conv.size * 2
                      + w_fc.size * 2
                      + (b_conv.size + fs_col.size + b_fc.size) * 4
                      + batch * NL * 4)
    cost = pl.CostEstimate(flops=int(flops), transcendentals=int(batch * NL),
                           bytes_accessed=int(bytes_accessed))

    # Rough per-step VMEM working set: double-buffered ids/out blocks,
    # resident weights, and in-kernel onehot / xe / conv intermediates.
    step_bytes = (2 * (tile_b * Lp * 4 + tile_b * NL * 4)
                  + emb.size * 2 + w_conv.size * 2 + w_fc.size * 2
                  + tile_b * Lp * V_pad * 4
                  + 3 * tile_b * Lp * E_pad * 2
                  + 2 * tile_b * Lp * NF * 4)
    # Clamp to a budget safe on v7x (64 MiB physical) and v5e/v6e (128 MiB);
    # the scoped default is 32 MiB.
    vmem_limit = int(min(max(2 * step_bytes, 32 * 1024 * 1024),
                         56 * 1024 * 1024))

    return pl.pallas_call(
        kern,
        out_shape=jax.ShapeDtypeStruct((batch, NL), jnp.float32),
        grid=(n_tiles,),
        in_specs=[
            pl.BlockSpec((tile_b * Lp, 1), lambda i: (i, 0)),
            pl.BlockSpec((V_pad, E_pad), lambda i: (0, 0)),
            pl.BlockSpec((max_fs, E_pad, NF), lambda i: (0, 0, 0)),
            pl.BlockSpec((1, NF), lambda i: (0, 0)),
            pl.BlockSpec((1, NF), lambda i: (0, 0)),
            pl.BlockSpec((NF, NL), lambda i: (0, 0)),
            pl.BlockSpec((1, NL), lambda i: (0, 0)),
        ],
        out_specs=pl.BlockSpec((tile_b, NL), lambda i: (i, 0)),
        compiler_params=pltpu.CompilerParams(
            dimension_semantics=("parallel",),
            vmem_limit_bytes=vmem_limit),
        cost_estimate=cost,
    )(ids_col, emb, w_conv, b_conv, fs_col, w_fc, b_fc)


# ----------------------------------------------------------------------------
# One-time weight packing (hoisted out of the per-call jitted path)
# ----------------------------------------------------------------------------
def pack_params(params):
    """Pack checkpoint weights into lane-dense TPU layouts (called once)."""
    emb = params["embedding"]
    V, E = emb.shape
    filter_sizes = tuple(w.shape[0] for (w, _) in params["convs"])
    F = params["convs"][0][0].shape[-1]
    labels = params["fc_w"].shape[-1]
    max_fs = max(filter_sizes)

    V_pad = _round_up(V, _LANE)
    E_pad = _round_up(E, _LANE)
    NF = _round_up(len(filter_sizes) * F, _LANE)
    NL = _round_up(labels, _LANE)

    emb_p = jnp.zeros((V_pad, E_pad), jnp.float32)
    emb_p = emb_p.at[:V, :E].set(emb).astype(jnp.bfloat16)

    w_conv = jnp.zeros((max_fs, E_pad, NF), jnp.float32)
    b_conv = jnp.zeros((1, NF), jnp.float32)
    fs_col = jnp.zeros((1, NF), jnp.int32)
    for j, (w, b) in enumerate(params["convs"]):          # w: [fs, E, F]
        fs = w.shape[0]
        c0, c1 = j * F, (j + 1) * F
        w_conv = w_conv.at[:fs, :E, c0:c1].set(w)
        b_conv = b_conv.at[:, c0:c1].set(b)
        fs_col = fs_col.at[:, c0:c1].set(fs)
    w_conv = w_conv.astype(jnp.bfloat16)

    # clip_weight(3) on the unpadded fc weight.  PyTorch re-clips each forward;
    # for fixed inference weights doing it once here is equivalent.
    w_fc = params["fc_w"]
    norm = jnp.linalg.norm(w_fc)
    coef = jnp.where(norm > 3.0, 3.0 / (norm + 1e-6), 1.0)
    w_fc = w_fc * coef
    w_fc_p = jnp.zeros((NF, NL), jnp.float32)
    w_fc_p = w_fc_p.at[:w_fc.shape[0], :labels].set(w_fc).astype(jnp.bfloat16)
    b_fc_p = jnp.zeros((1, NL), jnp.float32).at[:, :labels].set(params["fc_b"])

    return {"emb": emb_p, "w_conv": w_conv, "b_conv": b_conv,
            "fs_col": fs_col, "w_fc": w_fc_p, "b_fc": b_fc_p,
            "max_fs": max_fs, "labels": labels}


# ----------------------------------------------------------------------------
# Forward wrapper
# ----------------------------------------------------------------------------
def _pick_tile_b(batch, seq_len_pad, v_pad, e_pad, nf, nl):
    """Largest batch tile (<=64, multiple of 8, >=2 grid steps) in budget."""
    def step_bytes(tb):
        bl = tb * seq_len_pad
        return (2 * (bl * 4 + tb * nl * 4)       # double-buffered ids + out
                + bl * v_pad * 4                 # one-hot iota / compare
                + 3 * bl * e_pad * 2             # xe + shifted views (bf16)
                + 2 * bl * nf * 4)               # f32 conv activations
    budget = 16 * 1024 * 1024                    # conservative: fits v7x too
    for cand in (64, 32, 16, 8):
        if batch % cand == 0 and batch // cand >= 2 and step_bytes(cand) <= budget:
            return cand
    return batch                                 # tiny batch: single grid step


@functools.partial(
    jax.jit,
    static_argnames=("seq_len", "seq_len_pad", "labels", "max_fs", "tile_b"))
def _textcnn_jit(ids, emb, w_conv, b_conv, fs_col, w_fc, b_fc,
                 *, seq_len, seq_len_pad, labels, max_fs, tile_b):
    B = ids.shape[0]
    if seq_len_pad != seq_len:                   # pad L to a multiple of 8
        ids = jnp.pad(ids, ((0, 0), (0, seq_len_pad - seq_len)))
    ids_col = ids.reshape(B * seq_len_pad, 1)
    out = textcnn_fused(ids_col, emb, w_conv, b_conv, fs_col, w_fc, b_fc,
                        batch=B, seq_len=seq_len, seq_len_pad=seq_len_pad,
                        labels=labels, max_fs=max_fs, tile_b=tile_b)
    return out[:, :labels]


def textcnn_forward(packed, x_ids):
    """x_ids: [B, 1, L] (or [B, L]) int32 token ids -> [B, labels] log-probs."""
    if x_ids.ndim == 2:
        x_ids = x_ids[:, None, :]
    ids = x_ids[:, 0, :]
    B, L = ids.shape
    Lp = _round_up(L, _SUBLANE)
    V_pad, E_pad = packed["emb"].shape
    NF = packed["w_conv"].shape[2]
    NL = packed["w_fc"].shape[1]
    tile_b = _pick_tile_b(B, Lp, V_pad, E_pad, NF, NL)
    # TODO(synk): dropout is treated as identity (inference mode).
    return _textcnn_jit(ids, packed["emb"], packed["w_conv"], packed["b_conv"],
                        packed["fs_col"], packed["w_fc"], packed["b_fc"],
                        seq_len=L, seq_len_pad=Lp, labels=packed["labels"],
                        max_fs=packed["max_fs"], tile_b=tile_b)


# ----------------------------------------------------------------------------
# Pure-JAX f32 reference (correctness check) + param init + example run
# ----------------------------------------------------------------------------
def textcnn_reference(params, x_ids):
    if x_ids.ndim == 2:
        x_ids = x_ids[:, None, :]
    ids = x_ids[:, 0, :]
    L = ids.shape[1]
    xe = params["embedding"][ids]                             # [B, L, E] f32
    feats = []
    for (w, b) in params["convs"]:                            # w: [fs, E, F]
        fs = w.shape[0]
        lo = L - fs + 1
        conv = sum(jnp.einsum("ble,ef->blf", xe[:, s:s + lo, :], w[s])
                   for s in range(fs)) + b[None]
        feats.append(jnp.max(jnp.maximum(conv, 0.0), axis=1))
    feats = jnp.concatenate(feats, axis=1)
    w_fc = params["fc_w"]
    norm = jnp.linalg.norm(w_fc)
    coef = jnp.where(norm > 3.0, 3.0 / (norm + 1e-6), 1.0)
    logits = feats @ (w_fc * coef) + params["fc_b"]
    return jax.nn.log_softmax(logits, axis=-1)


def init_params(key, *, vocab, embed_dim, filter_sizes, filter_number, labels):
    keys = jax.random.split(key, 3 + 2 * len(filter_sizes))
    params = {}
    params["embedding"] = 0.1 * jax.random.normal(
        keys[0], (vocab, embed_dim), jnp.float32)

    convs = []
    for i, fs in enumerate(filter_sizes):
        kw = keys[1 + 2 * i]
        kb = keys[2 + 2 * i]
        # PyTorch Conv2d weight is [F, 1, fs, E]; we store it as [fs, E, F].
        w = 0.2 * jax.random.normal(kw, (fs, embed_dim, filter_number),
                                    jnp.float32)
        b = 0.05 * jax.random.normal(kb, (1, filter_number), jnp.float32)
        convs.append((w, b))
    params["convs"] = convs

    feat_dim = len(filter_sizes) * filter_number
    # PyTorch fc weight is [labels, feat_dim]; we store the transpose.
    params["fc_w"] = 0.5 * jax.random.normal(
        keys[-2], (feat_dim, labels), jnp.float32)
    params["fc_b"] = 0.05 * jax.random.normal(
        keys[-1], (1, labels), jnp.float32)
    return params


if __name__ == "__main__":
    VOCAB = 50
    EMBED = 32          # embedding_size
    SEQ_LEN = 12        # text length (not 8-aligned: exercises the L padding)
    FILTER_SIZES = (2, 3, 4)
    FILTER_NUMBER = 8
    LABELS = 19
    BATCH = 16          # gives a 2-step parallel batch grid (tile_b = 8)

    root = jax.random.PRNGKey(0)
    k_params, k_ids = jax.random.split(root)

    params = init_params(
        k_params, vocab=VOCAB, embed_dim=EMBED, filter_sizes=FILTER_SIZES,
        filter_number=FILTER_NUMBER, labels=LABELS)
    packed = pack_params(params)    # one-time packing, outside per-call path

    x_ids = jax.random.randint(k_ids, (BATCH, 1, SEQ_LEN), 0, VOCAB,
                               dtype=jnp.int32)

    out = textcnn_forward(packed, x_ids)
    out = jax.block_until_ready(out)

    assert out.shape == (BATCH, LABELS), out.shape
    # log-softmax rows must (approximately) sum to 1 in prob space
    assert jnp.allclose(jnp.sum(jnp.exp(out), axis=-1), 1.0, atol=1e-4)
    # match the pure-JAX f32 reference (loose tol: kernel uses bf16 matmuls)
    ref = textcnn_reference(params, x_ids)
    assert jnp.max(jnp.abs(out - ref)) < 1e-1, jnp.max(jnp.abs(out - ref))
    print("KERNEL_OK")
</pallas_src>

<mosaic_0001>
module attributes {stable_mosaic.version = 11 : i64} {
  func.func @_textcnn_fused_kernel(%arg0: i32, %arg1: memref<128x1xi32, #tpu.memory_space<vmem>>, %arg2: memref<128x128xbf16, #tpu.memory_space<vmem>>, %arg3: memref<4x128x128xbf16, #tpu.memory_space<vmem>>, %arg4: memref<1x128xf32, #tpu.memory_space<vmem>>, %arg5: memref<1x128xi32, #tpu.memory_space<vmem>>, %arg6: memref<128x128xbf16, #tpu.memory_space<vmem>>, %arg7: memref<1x128xf32, #tpu.memory_space<vmem>>, %arg8: memref<8x128xf32, #tpu.memory_space<vmem>>) attributes {dimension_semantics = [#tpu.dimension_semantics<parallel>], iteration_bounds = array<i64: 2>, scalar_prefetch = 0 : i64, scratch_operands = 0 : i64, tpu.core_type = #tpu.core_type<tc>, window_params = [{transform_indices = @transform_0, window_bounds = array<i64: 128, 1>}, {pipeline_mode = #tpu.pipeline_mode<synchronous>, transform_indices = @transform_1, window_bounds = array<i64: 128, 128>}, {pipeline_mode = #tpu.pipeline_mode<synchronous>, transform_indices = @transform_2, window_bounds = array<i64: 4, 128, 128>}, {pipeline_mode = #tpu.pipeline_mode<synchronous>, transform_indices = @transform_3, window_bounds = array<i64: 1, 128>}, {pipeline_mode = #tpu.pipeline_mode<synchronous>, transform_indices = @transform_4, window_bounds = array<i64: 1, 128>}, {pipeline_mode = #tpu.pipeline_mode<synchronous>, transform_indices = @transform_5, window_bounds = array<i64: 128, 128>}, {pipeline_mode = #tpu.pipeline_mode<synchronous>, transform_indices = @transform_6, window_bounds = array<i64: 1, 128>}, {transform_indices = @transform_7, window_bounds = array<i64: 8, 128>}]} {
    %0 = tpu.iota {dimensions = array<i32: 1>} : vector<128x128xi32>
    %c0 = arith.constant 0 : index
    %c0_0 = arith.constant 0 : index
    %1 = vector.load %arg1[%c0, %c0_0] : memref<128x1xi32, #tpu.memory_space<vmem>>, vector<128x1xi32>
    %2 = vector.broadcast %1 : vector<128x1xi32> to vector<128x128xi32>
    %3 = arith.cmpi eq, %0, %2 : vector<128x128xi32>
    %4 = arith.extui %3 : vector<128x128xi1> to vector<128x128xi32>
    %5 = arith.sitofp %4 : vector<128x128xi32> to vector<128x128xf32>
    %6 = arith.truncf %5 : vector<128x128xf32> to vector<128x128xbf16>
    %c0_1 = arith.constant 0 : index
    %c0_2 = arith.constant 0 : index
    %7 = vector.load %arg2[%c0_1, %c0_2] : memref<128x128xbf16, #tpu.memory_space<vmem>>, vector<128x128xbf16>
    %cst = arith.constant dense<0.000000e+00> : vector<128x128xf32>
    %8 = tpu.matmul %6, %7, %cst {dimension_numbers = #tpu.dot_dimension_numbers<[1], [0], [0], [1], [0, 0, 1, 1], [], []>} : vector<128x128xbf16>, vector<128x128xbf16>, vector<128x128xf32> -> vector<128x128xf32>
    %9 = arith.truncf %8 : vector<128x128xf32> to vector<128x128xbf16>
    %cst_3 = arith.constant 0.000000e+00 : bf16
    %10 = vector.broadcast %cst_3 : bf16 to vector<16x128xbf16>
    %11 = tpu.concatenate %9, %10 in 0 : vector<128x128xbf16>, vector<16x128xbf16> -> vector<144x128xbf16>
    %cst_4 = arith.constant 0.000000e+00 : f32
    %12 = vector.broadcast %cst_4 : f32 to vector<128x128xf32>
    %13 = vector.extract_strided_slice %11 {offsets = [0, 0], sizes = [128, 128], strides = [1, 1]} : vector<144x128xbf16> to vector<128x128xbf16>
    %c0_5 = arith.constant 0 : index
    %c0_6 = arith.constant 0 : index
    %c0_7 = arith.constant 0 : index
    %14 = vector.load %arg3[%c0_5, %c0_6, %c0_7] : memref<4x128x128xbf16, #tpu.memory_space<vmem>>, vector<1x128x128xbf16>
    %15 = vector.shape_cast %14 : vector<1x128x128xbf16> to vector<128x128xbf16>
    %cst_8 = arith.constant dense<0.000000e+00> : vector<128x128xf32>
    %16 = tpu.matmul %13, %15, %cst_8 {dimension_numbers = #tpu.dot_dimension_numbers<[1], [0], [0], [1], [0, 0, 1, 1], [], []>} : vector<128x128xbf16>, vector<128x128xbf16>, vector<128x128xf32> -> vector<128x128xf32>
    %17 = arith.addf %12, %16 : vector<128x128xf32>
    %18 = vector.extract_strided_slice %11 {offsets = [1, 0], sizes = [128, 128], strides = [1, 1]} : vector<144x128xbf16> to vector<128x128xbf16>
    %c1 = arith.constant 1 : index
    %c0_9 = arith.constant 0 : index
    %c0_10 = arith.constant 0 : index
    %19 = vector.load %arg3[%c1, %c0_9, %c0_10] : memref<4x128x128xbf16, #tpu.memory_space<vmem>>, vector<1x128x128xbf16>
    %20 = vector.shape_cast %19 : vector<1x128x128xbf16> to vector<128x128xbf16>
    %cst_11 = arith.constant dense<0.000000e+00> : vector<128x128xf32>
    %21 = tpu.matmul %18, %20, %cst_11 {dimension_numbers = #tpu.dot_dimension_numbers<[1], [0], [0], [1], [0, 0, 1, 1], [], []>} : vector<128x128xbf16>, vector<128x128xbf16>, vector<128x128xf32> -> vector<128x128xf32>
    %22 = arith.addf %17, %21 : vector<128x128xf32>
    %23 = vector.extract_strided_slice %11 {offsets = [2, 0], sizes = [128, 128], strides = [1, 1]} : vector<144x128xbf16> to vector<128x128xbf16>
    %c2 = arith.constant 2 : index
    %c0_12 = arith.constant 0 : index
    %c0_13 = arith.constant 0 : index
    %24 = vector.load %arg3[%c2, %c0_12, %c0_13] : memref<4x128x128xbf16, #tpu.memory_space<vmem>>, vector<1x128x128xbf16>
    %25 = vector.shape_cast %24 : vector<1x128x128xbf16> to vector<128x128xbf16>
    %cst_14 = arith.constant dense<0.000000e+00> : vector<128x128xf32>
    %26 = tpu.matmul %23, %25, %cst_14 {dimension_numbers = #tpu.dot_dimension_numbers<[1], [0], [0], [1], [0, 0, 1, 1], [], []>} : vector<128x128xbf16>, vector<128x128xbf16>, vector<128x128xf32> -> vector<128x128xf32>
    %27 = arith.addf %22, %26 : vector<128x128xf32>
    %28 = vector.extract_strided_slice %11 {offsets = [3, 0], sizes = [128, 128], strides = [1, 1]} : vector<144x128xbf16> to vector<128x128xbf16>
    %c3 = arith.constant 3 : index
    %c0_15 = arith.constant 0 : index
    %c0_16 = arith.constant 0 : index
    %29 = vector.load %arg3[%c3, %c0_15, %c0_16] : memref<4x128x128xbf16, #tpu.memory_space<vmem>>, vector<1x128x128xbf16>
    %30 = vector.shape_cast %29 : vector<1x128x128xbf16> to vector<128x128xbf16>
    %cst_17 = arith.constant dense<0.000000e+00> : vector<128x128xf32>
    %31 = tpu.matmul %28, %30, %cst_17 {dimension_numbers = #tpu.dot_dimension_numbers<[1], [0], [0], [1], [0, 0, 1, 1], [], []>} : vector<128x128xbf16>, vector<128x128xbf16>, vector<128x128xf32> -> vector<128x128xf32>
    %32 = arith.addf %27, %31 : vector<128x128xf32>
    %c0_18 = arith.constant 0 : index
    %c0_19 = arith.constant 0 : index
    %33 = vector.load %arg4[%c0_18, %c0_19] : memref<1x128xf32, #tpu.memory_space<vmem>>, vector<1x128xf32>
    %34 = vector.broadcast %33 : vector<1x128xf32> to vector<128x128xf32>
    %35 = arith.addf %32, %34 : vector<128x128xf32>
    %cst_20 = arith.constant 0.000000e+00 : f32
    %36 = vector.broadcast %cst_20 : f32 to vector<128x128xf32>
    %37 = arith.maximumf %35, %36 : vector<128x128xf32>
    %c0_21 = arith.constant 0 : index
    %c0_22 = arith.constant 0 : index
    %38 = vector.load %arg5[%c0_21, %c0_22] : memref<1x128xi32, #tpu.memory_space<vmem>>, vector<1x128xi32>
    %c0_i32 = arith.constant 0 : i32
    %39 = vector.broadcast %c0_i32 : i32 to vector<1x128xi32>
    %40 = arith.cmpi sgt, %38, %39 : vector<1x128xi32>
    %c0_23 = arith.constant 0 : index
    %c0_24 = arith.constant 0 : index
    %41 = vector.load %arg5[%c0_23, %c0_24] : memref<1x128xi32, #tpu.memory_space<vmem>>, vector<1x128xi32>
    %c12_i32 = arith.constant 12 : i32
    %42 = vector.broadcast %c12_i32 : i32 to vector<1x128xi32>
    %43 = arith.subi %42, %41 : vector<1x128xi32>
    %c1_i32 = arith.constant 1 : i32
    %44 = vector.broadcast %c1_i32 : i32 to vector<1x128xi32>
    %45 = arith.addi %43, %44 : vector<1x128xi32>
    %c0_i32_25 = arith.constant 0 : i32
    %46 = vector.broadcast %c0_i32_25 : i32 to vector<1x128xi32>
    %47 = arith.select %40, %45, %46 : vector<1x128xi1>, vector<1x128xi32>
    %48 = vector.shape_cast %37 : vector<128x128xf32> to vector<8x16x128xf32>
    %49 = tpu.iota {dimensions = array<i32: 1>} : vector<8x16x128xi32>
    %50 = vector.shape_cast %47 : vector<1x128xi32> to vector<1x1x128xi32>
    %51 = vector.broadcast %50 : vector<1x1x128xi32> to vector<8x16x128xi32>
    %52 = arith.cmpi slt, %49, %51 : vector<8x16x128xi32>
    %cst_26 = arith.constant 0.000000e+00 : f32
    %53 = vector.broadcast %cst_26 : f32 to vector<8x16x128xf32>
    %54 = arith.select %52, %48, %53 : vector<8x16x128xi1>, vector<8x16x128xf32>
    %cst_27 = arith.constant dense<0xFF800000> : vector<8x128xf32>
    %55 = vector.multi_reduction <maximumf>, %54, %cst_27 [1] : vector<8x16x128xf32> to vector<8x128xf32>
    %56 = arith.truncf %55 : vector<8x128xf32> to vector<8x128xbf16>
    %c0_28 = arith.constant 0 : index
    %c0_29 = arith.constant 0 : index
    %57 = vector.load %arg6[%c0_28, %c0_29] : memref<128x128xbf16, #tpu.memory_space<vmem>>, vector<128x128xbf16>
    %cst_30 = arith.constant dense<0.000000e+00> : vector<8x128xf32>
    %58 = tpu.matmul %56, %57, %cst_30 {dimension_numbers = #tpu.dot_dimension_numbers<[1], [0], [0], [1], [0, 0, 1, 1], [], []>} : vector<8x128xbf16>, vector<128x128xbf16>, vector<8x128xf32> -> vector<8x128xf32>
    %c0_31 = arith.constant 0 : index
    %c0_32 = arith.constant 0 : index
    %59 = vector.load %arg7[%c0_31, %c0_32] : memref<1x128xf32, #tpu.memory_space<vmem>>, vector<1x128xf32>
    %60 = vector.broadcast %59 : vector<1x128xf32> to vector<8x128xf32>
    %61 = arith.addf %58, %60 : vector<8x128xf32>
    %62 = tpu.iota {dimensions = array<i32: 1>} : vector<8x128xi32>
    %c19_i32 = arith.constant 19 : i32
    %63 = vector.broadcast %c19_i32 : i32 to vector<8x128xi32>
    %64 = arith.cmpi slt, %62, %63 : vector<8x128xi32>
    %cst_33 = arith.constant -1.000000e+30 : f32
    %65 = vector.broadcast %cst_33 : f32 to vector<8x128xf32>
    %66 = arith.select %64, %61, %65 : vector<8x128xi1>, vector<8x128xf32>
    %cst_34 = arith.constant dense<0xFF800000> : vector<8xf32>
    %67 = vector.multi_reduction <maximumf>, %66, %cst_34 [1] : vector<8x128xf32> to vector<8xf32>
    %68 = vector.shape_cast %67 : vector<8xf32> to vector<8x1xf32>
    %69 = vector.broadcast %68 : vector<8x1xf32> to vector<8x128xf32>
    %70 = arith.subf %66, %69 : vector<8x128xf32>
    %71 = math.exp %70 : vector<8x128xf32>
    %cst_35 = arith.constant dense<0.000000e+00> : vector<8xf32>
    %72 = vector.multi_reduction <add>, %71, %cst_35 [1] : vector<8x128xf32> to vector<8xf32>
    %73 = vector.shape_cast %72 : vector<8xf32> to vector<8x1xf32>
    %74 = math.log %73 : vector<8x1xf32>
    %75 = vector.broadcast %74 : vector<8x1xf32> to vector<8x128xf32>
    %76 = arith.subf %70, %75 : vector<8x128xf32>
    %c0_36 = arith.constant 0 : index
    %c0_37 = arith.constant 0 : index
    %77 = vector.load %arg8[%c0_36, %c0_37] : memref<8x128xf32, #tpu.memory_space<vmem>>, vector<8x128xf32>
    tpu.vector_store %arg8[%c0_36, %c0_37], %76 {strides = array<i32>} : memref<8x128xf32, #tpu.memory_space<vmem>>, vector<8x128xf32>,
    return
  }
  func.func @transform_0(%arg0: i32) -> (i32, i32) {
    %c0_i32 = arith.constant 0 : i32
    %c0_i32_0 = arith.constant 0 : i32
    return %arg0, %c0_i32 : i32, i32
  }
  func.func @transform_1(%arg0: i32) -> (i32, i32) {
    %c0_i32 = arith.constant 0 : i32
    %c0_i32_0 = arith.constant 0 : i32
    %c0_i32_1 = arith.constant 0 : i32
    return %c0_i32, %c0_i32_0 : i32, i32
  }
  func.func @transform_2(%arg0: i32) -> (i32, i32, i32) {
    %c0_i32 = arith.constant 0 : i32
    %c0_i32_0 = arith.constant 0 : i32
    %c0_i32_1 = arith.constant 0 : i32
    %c0_i32_2 = arith.constant 0 : i32
    return %c0_i32, %c0_i32_0, %c0_i32_1 : i32, i32, i32
  }
  func.func @transform_3(%arg0: i32) -> (i32, i32) {
    %c0_i32 = arith.constant 0 : i32
    %c0_i32_0 = arith.constant 0 : i32
    %c0_i32_1 = arith.constant 0 : i32
    return %c0_i32, %c0_i32_0 : i32, i32
  }
  func.func @transform_4(%arg0: i32) -> (i32, i32) {
    %c0_i32 = arith.constant 0 : i32
    %c0_i32_0 = arith.constant 0 : i32
    %c0_i32_1 = arith.constant 0 : i32
    return %c0_i32, %c0_i32_0 : i32, i32
  }
  func.func @transform_5(%arg0: i32) -> (i32, i32) {
    %c0_i32 = arith.constant 0 : i32
    %c0_i32_0 = arith.constant 0 : i32
    %c0_i32_1 = arith.constant 0 : i32
    return %c0_i32, %c0_i32_0 : i32, i32
  }
  func.func @transform_6(%arg0: i32) -> (i32, i32) {
    %c0_i32 = arith.constant 0 : i32
    %c0_i32_0 = arith.constant 0 : i32
    %c0_i32_1 = arith.constant 0 : i32
    return %c0_i32, %c0_i32_0 : i32, i32
  }
  func.func @transform_7(%arg0: i32) -> (i32, i32) {
    %c0_i32 = arith.constant 0 : i32
    %c0_i32_0 = arith.constant 0 : i32
    return %arg0, %c0_i32 : i32, i32
  }
}

</mosaic_0001>

<llo_original>
// kernel: _textcnn_jit.1
$region0: #{_textcnn_jit.1}
  #allocation0 [shape = 'u32[]', space=smem, size = 0x4, offset = 0x4, fixed_abs, tag = 'smem constant byte address 0x4 - core index']
  #allocation1 [shape = 'u32[72,128]{1,0:T(1,128)}', space=vmem, size = 0x9000, scoped, tag = 'internal scratch']
  %s0 = inlined_call_operand.vmem [shape: s32[256,1], index: 0, kind: input, shape index: {}]
  %s1 = inlined_call_operand.hbm [shape: bf16[128,128], index: 1, kind: input, shape index: {}]
  %s2 = inlined_call_operand.vmem [shape: bf16[4,128,128], index: 2, kind: input, shape index: {}]
  %s3 = inlined_call_operand.vmem [shape: f32[1,128], index: 3, kind: input, shape index: {}]
  %s4 = inlined_call_operand.vmem [shape: s32[1,128], index: 4, kind: input, shape index: {}]
  %s5 = inlined_call_operand.hbm [shape: bf16[128,128], index: 5, kind: input, shape index: {}]
  %s6 = inlined_call_operand.vmem [shape: f32[1,128], index: 6, kind: input, shape index: {}]
  %s7 = inlined_call_operand.hbm [shape: f32[16,128], index: 7, kind: output, shape index: {}]
  %s8 = sld [smem:[#allocation0]]
  $region69: #{_textcnn_jit.1} parent=0
    _
  %s10 = ssub.s32 1, %s8
  %s11 = scalar_select 0, %s10, %s8
  $region1: #{_textcnn_jit.1} parent=0
    #allocation2 [shape = 'u8[32768]{0}', space=vmem, size = 0x8000, scoped, tag = 'input window, operand 1, single buffered']
    #allocation3 [shape = 's32[2]{0}', space=sflag, size = 0x8, scoped, tag = 'scoped memory for _textcnn_jit.1']
    #allocation4 [shape = 's32[2]{0}', space=sflag, size = 0x8, scoped, tag = 'scoped memory for _textcnn_jit.1']
    #allocation5 [shape = 'u8[32768]{0}', space=vmem, size = 0x8000, scoped, tag = 'input window, operand 5, single buffered']
    #allocation6 [shape = 's32[1]{0}', space=sflag, size = 0x4, scoped, tag = 'scoped memory for _textcnn_jit.1']
    #allocation7 [shape = 'u8[8192]{0}', space=vmem, size = 0x2000, scoped, tag = 'output window, operand 0']
    %12 = vsyncpa [#allocation3], 0
    %13 = vsyncpa [#allocation6], 0
    %14 = vsyncpa [#allocation4], 0
    %s15 = scalar_lea.sflag [#allocation4], 1
    %16 = vsyncpa %s15, 0
    loop: start=0, step=1, limit=4
    $region2: #{_textcnn_jit.1} parent=1 // loop_pre_header
      _
    $region3: #{_textcnn_jit.1} parent=1 // loop_header
      %s18 = sphi 0, %s22
      %p19 = scmp.ge.s32.totalorder %s18, 4
      %s28 = sphi 0, %s30
      %s31 = sphi 0, %s28
      %s32 = sphi 0, %s31
      %s48 = sphi 0, %s32
      %s52 = sphi 0, %s52
      %s54 = sphi 0, %s52
      %s55 = sphi 0, %s54
      %s69 = sphi 0, %s55
      %s73 = sphi 0, %s73
      %s75 = sphi 0, %s73
      %s76 = sphi 0, %s75
      %s90 = sphi 0, %s76
      %s94 = sphi 0, %s94
      %s96 = sphi 0, %s94
      %s97 = sphi 0, %s96
      %s111 = sphi 0, %s97
      %s115 = sphi 0, %s115
      %s117 = sphi 0, %s115
      %s118 = sphi 0, %s117
      %s132 = sphi 0, %s118
      %s136 = sphi 0, %s136
      %s138 = sphi 0, %s136
      %s139 = sphi 0, %s138
      %s153 = sphi 0, %s139
      %s157 = sphi 0, %s157
      %s159 = sphi 0, %s157
      %s160 = sphi 0, %s159
      %s174 = sphi 0, %s160
      %s180 = sphi 0, %s182
      %s183 = sphi 0, %s180
      %s184 = sphi 0, %s183
      %s200 = sphi 0, %s184
    $region4: #{_textcnn_jit.1} parent=1 // loop_header_branch
      %21 = sbr.rel (%p19) target = $region8
    $region5: #{_textcnn_jit.1} parent=1 // loop_body
      %s23 = ssub.s32 %s18, 1
      %s24 = ssub.s32 %s18, 2
      %s25 = sadd.s32 %s18, 1
      %s26 = ssub.s32 %s18, %s25
      %p27 = scmp.eq.s32.totalorder %s26, 0
      %s29 = sadd.s32 %s28, 1
      %s30 = scalar_select %p27, %s28, %s29
      %p33 = pneg %p27
      %p34 = scmp.eq.s32.totalorder %s18, 1
      %p35 = por %p33, %p34
      %p36 = scmp.ne.s32.totalorder %s28, %s31
      %p37 = scmp.eq.s32.totalorder %s18, 0
      %p38 = por %p36, %p37
      %p39 = scmp.ne.s32.totalorder %s28, %s31
      %p40 = scmp.eq.s32.totalorder %s23, 1
      %p41 = por %p39, %p40
      %p42 = scmp.ne.s32.totalorder %s31, %s32
      %p43 = scmp.eq.s32.totalorder %s23, 0
      %p44 = por %p42, %p43
      %p45 = scmp.ne.s32.totalorder %s31, %s32
      %p46 = scmp.eq.s32.totalorder %s24, 1
      %p47 = por %p45, %p46
      %p49 = scmp.ne.s32.totalorder %s32, %s48
      %p50 = scmp.eq.s32.totalorder %s24, 0
      %p51 = por %p49, %p50
      %s53 = sadd.s32 %s52, 1
      %p56 = scmp.eq.s32.totalorder %s18, 1
      %p57 = scmp.ne.s32.totalorder %s52, %s54
      %p58 = scmp.eq.s32.totalorder %s18, 0
      %p59 = por %p57, %p58
      %p60 = scmp.ne.s32.totalorder %s52, %s54
      %p61 = scmp.eq.s32.totalorder %s23, 1
      %p62 = por %p60, %p61
      %p63 = scmp.ne.s32.totalorder %s54, %s55
      %p64 = scmp.eq.s32.totalorder %s23, 0
      %p65 = por %p63, %p64
      %p66 = scmp.ne.s32.totalorder %s54, %s55
      %p67 = scmp.eq.s32.totalorder %s24, 1
      %p68 = por %p66, %p67
      %p70 = scmp.ne.s32.totalorder %s55, %s69
      %p71 = scmp.eq.s32.totalorder %s24, 0
      %p72 = por %p70, %p71
      %s74 = sadd.s32 %s73, 1
      %p77 = scmp.eq.s32.totalorder %s18, 1
      %p78 = scmp.ne.s32.totalorder %s73, %s75
      %p79 = scmp.eq.s32.totalorder %s18, 0
      %p80 = por %p78, %p79
      %p81 = scmp.ne.s32.totalorder %s73, %s75
      %p82 = scmp.eq.s32.totalorder %s23, 1
      %p83 = por %p81, %p82
      %p84 = scmp.ne.s32.totalorder %s75, %s76
      %p85 = scmp.eq.s32.totalorder %s23, 0
      %p86 = por %p84, %p85
      %p87 = scmp.ne.s32.totalorder %s75, %s76
      %p88 = scmp.eq.s32.totalorder %s24, 1
      %p89 = por %p87, %p88
      %p91 = scmp.ne.s32.totalorder %s76, %s90
      %p92 = scmp.eq.s32.totalorder %s24, 0
      %p93 = por %p91, %p92
      %s95 = sadd.s32 %s94, 1
      %p98 = scmp.eq.s32.totalorder %s18, 1
      %p99 = scmp.ne.s32.totalorder %s94, %s96
      %p100 = scmp.eq.s32.totalorder %s18, 0
      %p101 = por %p99, %p100
      %p102 = scmp.ne.s32.totalorder %s94, %s96
      %p103 = scmp.eq.s32.totalorder %s23, 1
      %p104 = por %p102, %p103
      %p105 = scmp.ne.s32.totalorder %s96, %s97
      %p106 = scmp.eq.s32.totalorder %s23, 0
      %p107 = por %p105, %p106
      %p108 = scmp.ne.s32.totalorder %s96, %s97
      %p109 = scmp.eq.s32.totalorder %s24, 1
      %p110 = por %p108, %p109
      %p112 = scmp.ne.s32.totalorder %s97, %s111
      %p113 = scmp.eq.s32.totalorder %s24, 0
      %p114 = por %p112, %p113
      %s116 = sadd.s32 %s115, 1
      %p119 = scmp.eq.s32.totalorder %s18, 1
      %p120 = scmp.ne.s32.totalorder %s115, %s117
      %p121 = scmp.eq.s32.totalorder %s18, 0
      %p122 = por %p120, %p121
      %p123 = scmp.ne.s32.totalorder %s115, %s117
      %p124 = scmp.eq.s32.totalorder %s23, 1
      %p125 = por %p123, %p124
      %p126 = scmp.ne.s32.totalorder %s117, %s118
      %p127 = scmp.eq.s32.totalorder %s23, 0
      %p128 = por %p126, %p127
      %p129 = scmp.ne.s32.totalorder %s117, %s118
      %p130 = scmp.eq.s32.totalorder %s24, 1
      %p131 = por %p129, %p130
      %p133 = scmp.ne.s32.totalorder %s118, %s132
      %p134 = scmp.eq.s32.totalorder %s24, 0
      %p135 = por %p133, %p134
      %s137 = sadd.s32 %s136, 1
      %p140 = scmp.eq.s32.totalorder %s18, 1
      %p141 = scmp.ne.s32.totalorder %s136, %s138
      %p142 = scmp.eq.s32.totalorder %s18, 0
      %p143 = por %p141, %p142
      %p144 = scmp.ne.s32.totalorder %s136, %s138
      %p145 = scmp.eq.s32.totalorder %s23, 1
      %p146 = por %p144, %p145
      %p147 = scmp.ne.s32.totalorder %s138, %s139
      %p148 = scmp.eq.s32.totalorder %s23, 0
      %p149 = por %p147, %p148
      %p150 = scmp.ne.s32.totalorder %s138, %s139
      %p151 = scmp.eq.s32.totalorder %s24, 1
      %p152 = por %p150, %p151
      %p154 = scmp.ne.s32.totalorder %s139, %s153
      %p155 = scmp.eq.s32.totalorder %s24, 0
      %p156 = por %p154, %p155
      %s158 = sadd.s32 %s157, 1
      %p161 = scmp.eq.s32.totalorder %s18, 1
      %p162 = scmp.ne.s32.totalorder %s157, %s159
      %p163 = scmp.eq.s32.totalorder %s18, 0
      %p164 = por %p162, %p163
      %p165 = scmp.ne.s32.totalorder %s157, %s159
      %p166 = scmp.eq.s32.totalorder %s23, 1
      %p167 = por %p165, %p166
      %p168 = scmp.ne.s32.totalorder %s159, %s160
      %p169 = scmp.eq.s32.totalorder %s23, 0
      %p170 = por %p168, %p169
      %p171 = scmp.ne.s32.totalorder %s159, %s160
      %p172 = scmp.eq.s32.totalorder %s24, 1
      %p173 = por %p171, %p172
      %p175 = scmp.ne.s32.totalorder %s160, %s174
      %p176 = scmp.eq.s32.totalorder %s24, 0
      %p177 = por %p175, %p176
      %s178 = ssub.s32 %s18, %s25
      %p179 = scmp.eq.s32.totalorder %s178, 0
      %s181 = sadd.s32 %s180, 1
      %s182 = scalar_select %p179, %s180, %s181
      %p185 = pneg %p179
      %p186 = scmp.eq.s32.totalorder %s18, 1
      %p187 = por %p185, %p186
      %p188 = scmp.ne.s32.totalorder %s180, %s183
      %p189 = scmp.eq.s32.totalorder %s18, 0
      %p190 = por %p188, %p189
      %p191 = scmp.ne.s32.totalorder %s180, %s183
      %p192 = scmp.eq.s32.totalorder %s23, 1
      %p193 = por %p191, %p192
      %p194 = scmp.ne.s32.totalorder %s183, %s184
      %p195 = scmp.eq.s32.totalorder %s23, 0
      %p196 = por %p194, %p195
      %p197 = scmp.ne.s32.totalorder %s183, %s184
      %p198 = scmp.eq.s32.totalorder %s24, 1
      %p199 = por %p197, %p198
      %p201 = scmp.ne.s32.totalorder %s184, %s200
      %p202 = scmp.eq.s32.totalorder %s24, 0
      %p203 = por %p201, %p202
      %p204 = scmp.le.s32.totalorder 1, %s18
      %p205 = scmp.lt.s32.totalorder %s18, 3
      %p206 = pnand %p204, %p205
      %p207 = pneg %p206
      // Predicated region
      $region9: #{_textcnn_jit.1} parent=5 // pred_check
        _
      $region10: #{_textcnn_jit.1} parent=5 // pred_check_branch
        %209 = sbr.rel (%p206) target = $region12
      $region11: #{_textcnn_jit.1} parent=5 // pred_region
        %s210 = ssub.s32 %s18, 1
        // Predicated region
        $region13: #{_textcnn_jit.1} parent=11 // pred_check
          %p211 = pneg %p65
        $region14: #{_textcnn_jit.1} parent=11 // pred_check_branch
          %213 = sbr.rel (%p211) target = $region16
        $region15: #{_textcnn_jit.1} parent=11 // pred_region
          %215 = vsyncadd [#allocation3], 0
          %s216 = sshll.u32 %s1, 4
          %s217 = int_to_ptr.hbm [resolvable:$true] %s216
          %s218 = sshll.u32 [#allocation2], 4
          %s219 = int_to_ptr.vmem [resolvable:$true] %s218
          %224 = dma.hbm_to_vmem [thread:$0]  %s217, 1024, %s219, [#allocation3], 64, 64, 4
        $region16: #{_textcnn_jit.1} parent=11 // pred_fallthru
          _
        // Predicated region
        $region17: #{_textcnn_jit.1} parent=11 // pred_check
          %p225 = pneg %p86
        $region18: #{_textcnn_jit.1} parent=11 // pred_check_branch
          %227 = sbr.rel (%p225) target = $region20
        $region19: #{_textcnn_jit.1} parent=11 // pred_region
          _
        $region20: #{_textcnn_jit.1} parent=11 // pred_fallthru
          _
        // Predicated region
        $region21: #{_textcnn_jit.1} parent=11 // pred_check
          %p228 = pneg %p107
        $region22: #{_textcnn_jit.1} parent=11 // pred_check_branch
          %230 = sbr.rel (%p228) target = $region24
        $region23: #{_textcnn_jit.1} parent=11 // pred_region
          _
        $region24: #{_textcnn_jit.1} parent=11 // pred_fallthru
          _
        // Predicated region
        $region25: #{_textcnn_jit.1} parent=11 // pred_check
          %p231 = pneg %p128
        $region26: #{_textcnn_jit.1} parent=11 // pred_check_branch
          %233 = sbr.rel (%p231) target = $region28
        $region27: #{_textcnn_jit.1} parent=11 // pred_region
          _
        $region28: #{_textcnn_jit.1} parent=11 // pred_fallthru
          _
        // Predicated region
        $region29: #{_textcnn_jit.1} parent=11 // pred_check
          %p234 = pneg %p149
        $region30: #{_textcnn_jit.1} parent=11 // pred_check_branch
          %236 = sbr.rel (%p234) target = $region32
        $region31: #{_textcnn_jit.1} parent=11 // pred_region
          %238 = vsyncadd [#allocation6], 0
          %s239 = sshll.u32 %s5, 4
          %s240 = int_to_ptr.hbm [resolvable:$true] %s239
          %s241 = sshll.u32 [#allocation5], 4
          %s242 = int_to_ptr.vmem [resolvable:$true] %s241
          %247 = dma.hbm_to_vmem [thread:$0]  %s240, 1024, %s242, [#allocation6], 64, 64, 4
        $region32: #{_textcnn_jit.1} parent=11 // pred_fallthru
          _
        // Predicated region
        $region33: #{_textcnn_jit.1} parent=11 // pred_check
          %p248 = pneg %p170
        $region34: #{_textcnn_jit.1} parent=11 // pred_check_branch
          %250 = sbr.rel (%p248) target = $region36
        $region35: #{_textcnn_jit.1} parent=11 // pred_region
          _
        $region36: #{_textcnn_jit.1} parent=11 // pred_fallthru
          _
      $region12: #{_textcnn_jit.1} parent=5 // pred_fallthru
        _
      %p251 = scmp.lt.s32.totalorder %s18, 2
      // Predicated region
      $region37: #{_textcnn_jit.1} parent=5 // pred_check
        %p252 = pneg %p251
      $region38: #{_textcnn_jit.1} parent=5 // pred_check_branch
        %254 = sbr.rel (%p252) target = $region40
      $region39: #{_textcnn_jit.1} parent=5 // pred_region
        // Predicated region
        $region41: #{_textcnn_jit.1} parent=39 // pred_check
          %p255 = pneg %p38
        $region42: #{_textcnn_jit.1} parent=39 // pred_check_branch
          %257 = sbr.rel (%p255) target = $region44
        $region43: #{_textcnn_jit.1} parent=39 // pred_region
          %s258 = smul.u32 16, %s18
          %p259 = scmp.lt.s32.totalorder %s258, 31
          %s260 = scalar_select %p259, %s258, 31
          %s261 = smul.addr %s260, 8
          %s262 = scalar_lea.vmem %s0, %s261
          %s263 = smul.u32 16, %s18
        $region44: #{_textcnn_jit.1} parent=39 // pred_fallthru
          _
      $region40: #{_textcnn_jit.1} parent=5 // pred_fallthru
        _
      %p264 = scmp.le.s32.totalorder 1, %s18
      %p265 = scmp.lt.s32.totalorder %s18, 3
      %p266 = pnand %p264, %p265
      %p267 = pneg %p266
      // Predicated region
      $region45: #{_textcnn_jit.1} parent=5 // pred_check
        _
      $region46: #{_textcnn_jit.1} parent=5 // pred_check_branch
        %269 = sbr.rel (%p266) target = $region48
      $region47: #{_textcnn_jit.1} parent=5 // pred_region
        %s270 = ssub.s32 %s18, 1
        // Predicated region
        $region49: #{_textcnn_jit.1} parent=47 // pred_check
          %p271 = pneg %p65
        $region50: #{_textcnn_jit.1} parent=47 // pred_check_branch
          %273 = sbr.rel (%p271) target = $region52
        $region51: #{_textcnn_jit.1} parent=47 // pred_region
          %275 = dma.done [#allocation3], 1024
        $region52: #{_textcnn_jit.1} parent=47 // pred_fallthru
          _
        // Predicated region
        $region53: #{_textcnn_jit.1} parent=47 // pred_check
          %p276 = pneg %p149
        $region54: #{_textcnn_jit.1} parent=47 // pred_check_branch
          %278 = sbr.rel (%p276) target = $region56
        $region55: #{_textcnn_jit.1} parent=47 // pred_region
          %280 = dma.done [#allocation6], 1024
        $region56: #{_textcnn_jit.1} parent=47 // pred_fallthru
          _
        %s281 = smul.u32 16, %s23
        %p282 = scmp.lt.s32.totalorder %s281, 31
        %s283 = scalar_select %p282, %s281, 31
        %s284 = smul.addr %s283, 8
        %s285 = scalar_lea.vmem %s0, %s284
        %p286 = pneg %p44
        %p287 = pneg %p41
        %p288 = pneg %p65
        %p289 = pneg %p62
        %p290 = pneg %p86
        %p291 = pneg %p83
        %p292 = pneg %p107
        %p293 = pneg %p104
        %p294 = pneg %p128
        %p295 = pneg %p125
        %p296 = pneg %p149
        %p297 = pneg %p146
        %p298 = pneg %p170
        %p299 = pneg %p167
        %p300 = pneg %p196
        %p301 = pneg %p193
        %s302 = sand.u32 %s183, 1
        %s303 = scalar_lea.sflag [#allocation4], %s302
        %s304 = sand.u32 %s183, 1
        %s305 = smul.addr %s304, 8
        %s306 = scalar_lea.vmem [#allocation7], %s305
        %s307 = smul.u32 16, %s23
        %p308 = scmp.lt.s32.totalorder %s307, 31
        %s309 = scalar_select %p308, %s307, 31
        %s310 = smul.addr %s309, 8
        %s311 = scalar_lea.vmem %s0, %s310
        %s312 = smul.u32 16, %s23
        %v314 = vlaneseq
        %v315 = vand.u32 %v314, 127
        %v316 = vld [vmem:[%s311] sm:$0xff]
        %v317 = vld [vmem:[%s311 + $0x8] sm:$0xff]
        %v318 = vld [vmem:[%s311 + $0x10] sm:$0xff]
        %v319 = vld [vmem:[%s311 + $0x18] sm:$0xff]
        %v320 = vld [vmem:[%s311 + $0x20] sm:$0xff]
        %v321 = vld [vmem:[%s311 + $0x28] sm:$0xff]
        %v322 = vld [vmem:[%s311 + $0x30] sm:$0xff]
        %v323 = vld [vmem:[%s311 + $0x38] sm:$0xff]
        %v324 = vld [vmem:[%s311 + $0x40] sm:$0xff]
        %v325 = vld [vmem:[%s311 + $0x48] sm:$0xff]
        %v326 = vld [vmem:[%s311 + $0x50] sm:$0xff]
        %v327 = vld [vmem:[%s311 + $0x58] sm:$0xff]
        %v328 = vld [vmem:[%s311 + $0x60] sm:$0xff]
        %v329 = vld [vmem:[%s311 + $0x68] sm:$0xff]
        %v330 = vld [vmem:[%s311 + $0x70] sm:$0xff]
        %v331 = vld [vmem:[%s311 + $0x78] sm:$0xff]
        %332 = vset.pattern.permute.xlu0 0
        %333 = vperm.xlu0 %332, %v316
        %v334 = vpop.permute.xlu0 %333
        %335 = vset.pattern.permute.xlu0 0
        %336 = vperm.xlu0 %335, %v317
        %v337 = vpop.permute.xlu0 %336
        %338 = vset.pattern.permute.xlu0 0
        %339 = vperm.xlu0 %338, %v318
        %v340 = vpop.permute.xlu0 %339
        %341 = vset.pattern.permute.xlu0 0
        %342 = vperm.xlu0 %341, %v319
        %v343 = vpop.permute.xlu0 %342
        %344 = vset.pattern.permute.xlu0 0
        %345 = vperm.xlu0 %344, %v320
        %v346 = vpop.permute.xlu0 %345
        %347 = vset.pattern.permute.xlu0 0
        %348 = vperm.xlu0 %347, %v321
        %v349 = vpop.permute.xlu0 %348
        %350 = vset.pattern.permute.xlu0 0
        %351 = vperm.xlu0 %350, %v322
        %v352 = vpop.permute.xlu0 %351
        %353 = vset.pattern.permute.xlu0 0
        %354 = vperm.xlu0 %353, %v323
        %v355 = vpop.permute.xlu0 %354
        %356 = vset.pattern.permute.xlu0 0
        %357 = vperm.xlu0 %356, %v324
        %v358 = vpop.permute.xlu0 %357
        %359 = vset.pattern.permute.xlu0 0
        %360 = vperm.xlu0 %359, %v325
        %v361 = vpop.permute.xlu0 %360
        %362 = vset.pattern.permute.xlu0 0
        %363 = vperm.xlu0 %362, %v326
        %v364 = vpop.permute.xlu0 %363
        %365 = vset.pattern.permute.xlu0 0
        %366 = vperm.xlu0 %365, %v327
        %v367 = vpop.permute.xlu0 %366
        %368 = vset.pattern.permute.xlu0 0
        %369 = vperm.xlu0 %368, %v328
        %v370 = vpop.permute.xlu0 %369
        %371 = vset.pattern.permute.xlu0 0
        %372 = vperm.xlu0 %371, %v329
        %v373 = vpop.permute.xlu0 %372
        %374 = vset.pattern.permute.xlu0 0
        %375 = vperm.xlu0 %374, %v330
        %v376 = vpop.permute.xlu0 %375
        %377 = vset.pattern.permute.xlu0 0
        %378 = vperm.xlu0 %377, %v331
        %v379 = vpop.permute.xlu0 %378
        %vm380 = vcmp.eq.s32.totalorder %v315, %v334
        %vm381 = vcmp.eq.s32.totalorder %v315, %v337
        %vm382 = vcmp.eq.s32.totalorder %v315, %v340
        %vm383 = vcmp.eq.s32.totalorder %v315, %v343
        %vm384 = vcmp.eq.s32.totalorder %v315, %v346
        %vm385 = vcmp.eq.s32.totalorder %v315, %v349
        %vm386 = vcmp.eq.s32.totalorder %v315, %v352
        %vm387 = vcmp.eq.s32.totalorder %v315, %v355
        %vm388 = vcmp.eq.s32.totalorder %v315, %v358
        %vm389 = vcmp.eq.s32.totalorder %v315, %v361
        %vm390 = vcmp.eq.s32.totalorder %v315, %v364
        %vm391 = vcmp.eq.s32.totalorder %v315, %v367
        %vm392 = vcmp.eq.s32.totalorder %v315, %v370
        %vm393 = vcmp.eq.s32.totalorder %v315, %v373
        %vm394 = vcmp.eq.s32.totalorder %v315, %v376
        %vm395 = vcmp.eq.s32.totalorder %v315, %v379
        %v396 = vsel %vm380, 1, 0
        %v397 = vsel %vm381, 1, 0
        %v398 = vsel %vm382, 1, 0
        %v399 = vsel %vm383, 1, 0
        %v400 = vsel %vm384, 1, 0
        %v401 = vsel %vm385, 1, 0
        %v402 = vsel %vm386, 1, 0
        %v403 = vsel %vm387, 1, 0
        %v404 = vsel %vm388, 1, 0
        %v405 = vsel %vm389, 1, 0
        %v406 = vsel %vm390, 1, 0
        %v407 = vsel %vm391, 1, 0
        %v408 = vsel %vm392, 1, 0
        %v409 = vsel %vm393, 1, 0
        %v410 = vsel %vm394, 1, 0
        %v411 = vsel %vm395, 1, 0
        %v412 = vcvt.s32.f32 %v396
        %v413 = vcvt.s32.f32 %v397
        %v414 = vcvt.s32.f32 %v398
        %v415 = vcvt.s32.f32 %v399
        %v416 = vcvt.s32.f32 %v400
        %v417 = vcvt.s32.f32 %v401
        %v418 = vcvt.s32.f32 %v402
        %v419 = vcvt.s32.f32 %v403
        %v420 = vcvt.s32.f32 %v404
        %v421 = vcvt.s32.f32 %v405
        %v422 = vcvt.s32.f32 %v406
        %v423 = vcvt.s32.f32 %v407
        %v424 = vcvt.s32.f32 %v408
        %v425 = vcvt.s32.f32 %v409
        %v426 = vcvt.s32.f32 %v410
        %v427 = vcvt.s32.f32 %v411
        %v428 = vpack.c.bf16 %v413, %v412
        %v429 = vpack.c.bf16 %v415, %v414
        %v430 = vpack.c.bf16 %v417, %v416
        %v431 = vpack.c.bf16 %v419, %v418
        %v432 = vpack.c.bf16 %v421, %v420
        %v433 = vpack.c.bf16 %v423, %v422
        %v434 = vpack.c.bf16 %v425, %v424
        %v435 = vpack.c.bf16 %v427, %v426
        %v436 = vld [vmem:[#allocation2] sm:$0xf]
        %v437 = vld [vmem:[#allocation2 + $0x4] sm:$0xf]
        %v438 = vld [vmem:[#allocation2 + $0x8] sm:$0xf]
        %v439 = vld [vmem:[#allocation2 + $0xc] sm:$0xf]
        %v440 = vld [vmem:[#allocation2 + $0x10] sm:$0xf]
        %v441 = vld [vmem:[#allocation2 + $0x14] sm:$0xf]
        %v442 = vld [vmem:[#allocation2 + $0x18] sm:$0xf]
        %v443 = vld [vmem:[#allocation2 + $0x1c] sm:$0xf]
        %v444 = vld [vmem:[#allocation2 + $0x20] sm:$0xf]
        %v445 = vld [vmem:[#allocation2 + $0x24] sm:$0xf]
        %v446 = vld [vmem:[#allocation2 + $0x28] sm:$0xf]
        %v447 = vld [vmem:[#allocation2 + $0x2c] sm:$0xf]
        %v448 = vld [vmem:[#allocation2 + $0x30] sm:$0xf]
        %v449 = vld [vmem:[#allocation2 + $0x34] sm:$0xf]
        %v450 = vld [vmem:[#allocation2 + $0x38] sm:$0xf]
        %v451 = vld [vmem:[#allocation2 + $0x3c] sm:$0xf]
        %v468 = vunpack.c.l.b16 %v436
        %v469 = vunpack.c.l.b16 %v437
        %v470 = vunpack.c.l.b16 %v438
        %v471 = vunpack.c.l.b16 %v439
        %v472 = vunpack.c.l.b16 %v440
        %v473 = vunpack.c.l.b16 %v441
        %v474 = vunpack.c.l.b16 %v442
        %v475 = vunpack.c.l.b16 %v443
        %v476 = vunpack.c.l.b16 %v444
        %v477 = vunpack.c.l.b16 %v445
        %v478 = vunpack.c.l.b16 %v446
        %v479 = vunpack.c.l.b16 %v447
        %v480 = vunpack.c.l.b16 %v448
        %v481 = vunpack.c.l.b16 %v449
        %v482 = vunpack.c.l.b16 %v450
        %v483 = vunpack.c.l.b16 %v451
        %v484 = vpack.c.b16 %v469, %v468
        %v485 = vpack.c.b16 %v471, %v470
        %v486 = vpack.c.b16 %v473, %v472
        %v487 = vpack.c.b16 %v475, %v474
        %v488 = vpack.c.b16 %v477, %v476
        %v489 = vpack.c.b16 %v479, %v478
        %v490 = vpack.c.b16 %v481, %v480
        %v491 = vpack.c.b16 %v483, %v482
        %500 = vmatpush.bf16.msra.mxu0 %v491
        %501 = vmatpush.bf16.msra.mxu0 %v490
        %502 = vmatpush.bf16.msra.mxu0 %v489
        %503 = vmatpush.bf16.msra.mxu0 %v488
        %504 = vmatpush.bf16.msra.mxu0 %v487
        %505 = vmatpush.bf16.msra.mxu0 %v486
        %506 = vmatpush.bf16.msra.mxu0 %v485
        %507 = vmatpush.bf16.msra.mxu0 %v484
        %508 = vmatmul.bf16.gmra.mxu0 %v428
        %v509 = vpop.f32.mrf.mxu0
        %v510 = vadd.f32 0.0, %v509
        %v511 = vpop.f32.mrf.mxu0
        %v512 = vadd.f32 0.0, %v511
        %513 = vmatmul.bf16.gmra.mxu0 %v429
        %v514 = vpop.f32.mrf.mxu0
        %v515 = vadd.f32 0.0, %v514
        %v516 = vpop.f32.mrf.mxu0
        %v517 = vadd.f32 0.0, %v516
        %518 = vmatmul.bf16.gmra.mxu0 %v430
        %v519 = vpop.f32.mrf.mxu0
        %v520 = vadd.f32 0.0, %v519
        %v521 = vpop.f32.mrf.mxu0
        %v522 = vadd.f32 0.0, %v521
        %523 = vmatmul.bf16.gmra.mxu0 %v431
        %v524 = vpop.f32.mrf.mxu0
        %v525 = vadd.f32 0.0, %v524
        %v526 = vpop.f32.mrf.mxu0
        %v527 = vadd.f32 0.0, %v526
        %528 = vmatmul.bf16.gmra.mxu0 %v432
        %v529 = vpop.f32.mrf.mxu0
        %v530 = vadd.f32 0.0, %v529
        %v531 = vpop.f32.mrf.mxu0
        %v532 = vadd.f32 0.0, %v531
        %533 = vmatmul.bf16.gmra.mxu0 %v433
        %v534 = vpop.f32.mrf.mxu0
        %v535 = vadd.f32 0.0, %v534
        %v536 = vpop.f32.mrf.mxu0
        %v537 = vadd.f32 0.0, %v536
        %538 = vmatmul.bf16.gmra.mxu0 %v434
        %v539 = vpop.f32.mrf.mxu0
        %v540 = vadd.f32 0.0, %v539
        %v541 = vpop.f32.mrf.mxu0
        %v542 = vadd.f32 0.0, %v541
        %543 = vmatmul.bf16.gmra.mxu0 %v435
        %v544 = vpop.f32.mrf.mxu0
        %v545 = vadd.f32 0.0, %v544
        %v546 = vpop.f32.mrf.mxu0
        %v547 = vadd.f32 0.0, %v546
        %548 = vdwg.mxu0
        %v549 = vpack.c.bf16 %v510, %v510
        %v550 = vpack.c.bf16 %v512, %v512
        %v551 = vpack.c.bf16 %v515, %v515
        %v552 = vpack.c.bf16 %v517, %v517
        %v553 = vpack.c.bf16 %v520, %v520
        %v554 = vpack.c.bf16 %v522, %v522
        %v555 = vpack.c.bf16 %v525, %v525
        %v556 = vpack.c.bf16 %v527, %v527
        %v557 = vpack.c.bf16 %v530, %v530
        %v558 = vpack.c.bf16 %v532, %v532
        %v559 = vpack.c.bf16 %v535, %v535
        %v560 = vpack.c.bf16 %v537, %v537
        %v561 = vpack.c.bf16 %v540, %v540
        %v562 = vpack.c.bf16 %v542, %v542
        %v563 = vpack.c.bf16 %v545, %v545
        %v564 = vpack.c.bf16 %v547, %v547
        %v581 = vunpack.c.l.b16 %v549
        %v582 = vunpack.c.l.b16 %v550
        %v583 = vunpack.c.l.b16 %v551
        %v584 = vunpack.c.l.b16 %v552
        %v585 = vunpack.c.l.b16 %v553
        %v586 = vunpack.c.l.b16 %v554
        %v587 = vunpack.c.l.b16 %v555
        %v588 = vunpack.c.l.b16 %v556
        %v589 = vunpack.c.l.b16 %v557
        %v590 = vunpack.c.l.b16 %v558
        %v591 = vunpack.c.l.b16 %v559
        %v592 = vunpack.c.l.b16 %v560
        %v593 = vunpack.c.l.b16 %v561
        %v594 = vunpack.c.l.b16 %v562
        %v595 = vunpack.c.l.b16 %v563
        %v596 = vunpack.c.l.b16 %v564
        %v597 = vpack.c.b16 %v582, %v581
        %v598 = vpack.c.b16 %v584, %v583
        %v599 = vpack.c.b16 %v586, %v585
        %v600 = vpack.c.b16 %v588, %v587
        %v601 = vpack.c.b16 %v590, %v589
        %v602 = vpack.c.b16 %v592, %v591
        %v603 = vpack.c.b16 %v594, %v593
        %v604 = vpack.c.b16 %v596, %v595
        %v613 = vld [vmem:[%s2] sm:$0xf]
        %v614 = vld [vmem:[%s2 + $0x4] sm:$0xf]
        %v615 = vld [vmem:[%s2 + $0x8] sm:$0xf]
        %v616 = vld [vmem:[%s2 + $0xc] sm:$0xf]
        %v617 = vld [vmem:[%s2 + $0x10] sm:$0xf]
        %v618 = vld [vmem:[%s2 + $0x14] sm:$0xf]
        %v619 = vld [vmem:[%s2 + $0x18] sm:$0xf]
        %v620 = vld [vmem:[%s2 + $0x1c] sm:$0xf]
        %v621 = vld [vmem:[%s2 + $0x20] sm:$0xf]
        %v622 = vld [vmem:[%s2 + $0x24] sm:$0xf]
        %v623 = vld [vmem:[%s2 + $0x28] sm:$0xf]
        %v624 = vld [vmem:[%s2 + $0x2c] sm:$0xf]
        %v625 = vld [vmem:[%s2 + $0x30] sm:$0xf]
        %v626 = vld [vmem:[%s2 + $0x34] sm:$0xf]
        %v627 = vld [vmem:[%s2 + $0x38] sm:$0xf]
        %v628 = vld [vmem:[%s2 + $0x3c] sm:$0xf]
        %s629 = scalar_lea.vmem %s2, 64
        %v630 = vld [vmem:[%s629] sm:$0xf]
        %v631 = vld [vmem:[%s629 + $0x4] sm:$0xf]
        %v632 = vld [vmem:[%s629 + $0x8] sm:$0xf]
        %v633 = vld [vmem:[%s629 + $0xc] sm:$0xf]
        %v634 = vld [vmem:[%s629 + $0x10] sm:$0xf]
        %v635 = vld [vmem:[%s629 + $0x14] sm:$0xf]
        %v636 = vld [vmem:[%s629 + $0x18] sm:$0xf]
        %v637 = vld [vmem:[%s629 + $0x1c] sm:$0xf]
        %v638 = vld [vmem:[%s629 + $0x20] sm:$0xf]
        %v639 = vld [vmem:[%s629 + $0x24] sm:$0xf]
        %v640 = vld [vmem:[%s629 + $0x28] sm:$0xf]
        %v641 = vld [vmem:[%s629 + $0x2c] sm:$0xf]
        %v642 = vld [vmem:[%s629 + $0x30] sm:$0xf]
        %v643 = vld [vmem:[%s629 + $0x34] sm:$0xf]
        %v644 = vld [vmem:[%s629 + $0x38] sm:$0xf]
        %v645 = vld [vmem:[%s629 + $0x3c] sm:$0xf]
        %vm646 = vsmask.f32 7424
        %v648 = vshrl.u32 %v597, 16
        %v650 = vshll.u32 %v597, 16
        %v652 = vrot.slane %v650, 1
        %v653 = vor.u32 %v648, %v652
        %v655 = vshll.u32 %v598, 16
        %v657 = vrot.slane %v655, 1
        %v658 = vsel %vm646, %v653, %v657
        %v659 = vshrl.u32 %v598, 16
        %v661 = vor.u32 %v659, %v657
        %v663 = vshll.u32 %v599, 16
        %v665 = vrot.slane %v663, 1
        %v666 = vsel %vm646, %v661, %v665
        %v667 = vshrl.u32 %v599, 16
        %v669 = vor.u32 %v667, %v665
        %v671 = vshll.u32 %v600, 16
        %v673 = vrot.slane %v671, 1
        %v674 = vsel %vm646, %v669, %v673
        %v675 = vshrl.u32 %v600, 16
        %v677 = vor.u32 %v675, %v673
        %v679 = vshll.u32 %v601, 16
        %v681 = vrot.slane %v679, 1
        %v682 = vsel %vm646, %v677, %v681
        %v683 = vshrl.u32 %v601, 16
        %v685 = vor.u32 %v683, %v681
        %v687 = vshll.u32 %v602, 16
        %v689 = vrot.slane %v687, 1
        %v690 = vsel %vm646, %v685, %v689
        %v691 = vshrl.u32 %v602, 16
        %v693 = vor.u32 %v691, %v689
        %v695 = vshll.u32 %v603, 16
        %v697 = vrot.slane %v695, 1
        %v698 = vsel %vm646, %v693, %v697
        %v699 = vshrl.u32 %v603, 16
        %v701 = vor.u32 %v699, %v697
        %v703 = vshll.u32 %v604, 16
        %v705 = vrot.slane %v703, 1
        %v706 = vsel %vm646, %v701, %v705
        %v707 = vshrl.u32 %v604, 16
        %v709 = vor.u32 %v707, %v705
        %v711 = vshll.u32 0, 16
        %v713 = vrot.slane %v711, 1
        %v714 = vsel %vm646, %v709, %v713
        %v739 = vunpack.c.l.b16 %v630
        %v740 = vunpack.c.l.b16 %v631
        %v741 = vunpack.c.l.b16 %v632
        %v742 = vunpack.c.l.b16 %v633
        %v743 = vunpack.c.l.b16 %v634
        %v744 = vunpack.c.l.b16 %v635
        %v745 = vunpack.c.l.b16 %v636
        %v746 = vunpack.c.l.b16 %v637
        %v747 = vunpack.c.l.b16 %v638
        %v748 = vunpack.c.l.b16 %v639
        %v749 = vunpack.c.l.b16 %v640
        %v750 = vunpack.c.l.b16 %v641
        %v751 = vunpack.c.l.b16 %v642
        %v752 = vunpack.c.l.b16 %v643
        %v753 = vunpack.c.l.b16 %v644
        %v754 = vunpack.c.l.b16 %v645
        %v755 = vpack.c.b16 %v740, %v739
        %v756 = vpack.c.b16 %v742, %v741
        %v757 = vpack.c.b16 %v744, %v743
        %v758 = vpack.c.b16 %v746, %v745
        %v759 = vpack.c.b16 %v748, %v747
        %v760 = vpack.c.b16 %v750, %v749
        %v761 = vpack.c.b16 %v752, %v751
        %v762 = vpack.c.b16 %v754, %v753
        %771 = vmatpush.bf16.msra.mxu0 %v762
        %772 = vmatpush.bf16.msra.mxu0 %v761
        %773 = vmatpush.bf16.msra.mxu0 %v760
        %774 = vmatpush.bf16.msra.mxu0 %v759
        %775 = vmatpush.bf16.msra.mxu0 %v758
        %776 = vmatpush.bf16.msra.mxu0 %v757
        %777 = vmatpush.bf16.msra.mxu0 %v756
        %778 = vmatpush.bf16.msra.mxu0 %v755
        %779 = vmatmul.bf16.gmra.mxu0 %v658
        %v780 = vpop.f32.mrf.mxu0
        %v781 = vadd.f32 0.0, %v780
        %v782 = vpop.f32.mrf.mxu0
        %v783 = vadd.f32 0.0, %v782
        %784 = vmatmul.bf16.gmra.mxu0 %v666
        %v785 = vpop.f32.mrf.mxu0
        %v786 = vadd.f32 0.0, %v785
        %v787 = vpop.f32.mrf.mxu0
        %v788 = vadd.f32 0.0, %v787
        %789 = vmatmul.bf16.gmra.mxu0 %v674
        %v790 = vpop.f32.mrf.mxu0
        %v791 = vadd.f32 0.0, %v790
        %v792 = vpop.f32.mrf.mxu0
        %v793 = vadd.f32 0.0, %v792
        %794 = vmatmul.bf16.gmra.mxu0 %v682
        %v795 = vpop.f32.mrf.mxu0
        %v796 = vadd.f32 0.0, %v795
        %v797 = vpop.f32.mrf.mxu0
        %v798 = vadd.f32 0.0, %v797
        %799 = vmatmul.bf16.gmra.mxu0 %v690
        %v800 = vpop.f32.mrf.mxu0
        %v801 = vadd.f32 0.0, %v800
        %v802 = vpop.f32.mrf.mxu0
        %v803 = vadd.f32 0.0, %v802
        %804 = vmatmul.bf16.gmra.mxu0 %v698
        %v805 = vpop.f32.mrf.mxu0
        %v806 = vadd.f32 0.0, %v805
        %v807 = vpop.f32.mrf.mxu0
        %v808 = vadd.f32 0.0, %v807
        %809 = vmatmul.bf16.gmra.mxu0 %v706
        %v810 = vpop.f32.mrf.mxu0
        %v811 = vadd.f32 0.0, %v810
        %v812 = vpop.f32.mrf.mxu0
        %v813 = vadd.f32 0.0, %v812
        %814 = vmatmul.bf16.gmra.mxu0 %v714
        %v815 = vpop.f32.mrf.mxu0
        %v816 = vadd.f32 0.0, %v815
        %v817 = vpop.f32.mrf.mxu0
        %v818 = vadd.f32 0.0, %v817
        %819 = vdwg.mxu0
        %v836 = vunpack.c.l.b16 %v613
        %v837 = vunpack.c.l.b16 %v614
        %v838 = vunpack.c.l.b16 %v615
        %v839 = vunpack.c.l.b16 %v616
        %v840 = vunpack.c.l.b16 %v617
        %v841 = vunpack.c.l.b16 %v618
        %v842 = vunpack.c.l.b16 %v619
        %v843 = vunpack.c.l.b16 %v620
        %v844 = vunpack.c.l.b16 %v621
        %v845 = vunpack.c.l.b16 %v622
        %v846 = vunpack.c.l.b16 %v623
        %v847 = vunpack.c.l.b16 %v624
        %v848 = vunpack.c.l.b16 %v625
        %v849 = vunpack.c.l.b16 %v626
        %v850 = vunpack.c.l.b16 %v627
        %v851 = vunpack.c.l.b16 %v628
        %v852 = vpack.c.b16 %v837, %v836
        %v853 = vpack.c.b16 %v839, %v838
        %v854 = vpack.c.b16 %v841, %v840
        %v855 = vpack.c.b16 %v843, %v842
        %v856 = vpack.c.b16 %v845, %v844
        %v857 = vpack.c.b16 %v847, %v846
        %v858 = vpack.c.b16 %v849, %v848
        %v859 = vpack.c.b16 %v851, %v850
        %868 = vmatpush.bf16.msra.mxu0 %v859
        %869 = vmatpush.bf16.msra.mxu0 %v858
        %870 = vmatpush.bf16.msra.mxu0 %v857
        %871 = vmatpush.bf16.msra.mxu0 %v856
        %872 = vmatpush.bf16.msra.mxu0 %v855
        %873 = vmatpush.bf16.msra.mxu0 %v854
        %874 = vmatpush.bf16.msra.mxu0 %v853
        %875 = vmatpush.bf16.msra.mxu0 %v852
        %876 = vmatmul.bf16.gmra.mxu0 %v597
        %v877 = vpop.f32.mrf.mxu0
        %v878 = vadd.f32 %v781, %v877
        %v879 = vpop.f32.mrf.mxu0
        %v880 = vadd.f32 %v783, %v879
        %881 = vmatmul.bf16.gmra.mxu0 %v598
        %v882 = vpop.f32.mrf.mxu0
        %v883 = vadd.f32 %v786, %v882
        %v884 = vpop.f32.mrf.mxu0
        %v885 = vadd.f32 %v788, %v884
        %886 = vmatmul.bf16.gmra.mxu0 %v599
        %v887 = vpop.f32.mrf.mxu0
        %v888 = vadd.f32 %v791, %v887
        %v889 = vpop.f32.mrf.mxu0
        %v890 = vadd.f32 %v793, %v889
        %891 = vmatmul.bf16.gmra.mxu0 %v600
        %v892 = vpop.f32.mrf.mxu0
        %v893 = vadd.f32 %v796, %v892
        %v894 = vpop.f32.mrf.mxu0
        %v895 = vadd.f32 %v798, %v894
        %896 = vmatmul.bf16.gmra.mxu0 %v601
        %v897 = vpop.f32.mrf.mxu0
        %v898 = vadd.f32 %v801, %v897
        %v899 = vpop.f32.mrf.mxu0
        %v900 = vadd.f32 %v803, %v899
        %901 = vmatmul.bf16.gmra.mxu0 %v602
        %v902 = vpop.f32.mrf.mxu0
        %v903 = vadd.f32 %v806, %v902
        %v904 = vpop.f32.mrf.mxu0
        %v905 = vadd.f32 %v808, %v904
        %906 = vmatmul.bf16.gmra.mxu0 %v603
        %v907 = vpop.f32.mrf.mxu0
        %v908 = vadd.f32 %v811, %v907
        %v909 = vpop.f32.mrf.mxu0
        %v910 = vadd.f32 %v813, %v909
        %911 = vmatmul.bf16.gmra.mxu0 %v604
        %v912 = vpop.f32.mrf.mxu0
        %v913 = vadd.f32 %v816, %v912
        %v914 = vpop.f32.mrf.mxu0
        %v915 = vadd.f32 %v818, %v914
        %916 = vdwg.mxu0
        %s917 = scalar_lea.vmem %s2, 128
        %v918 = vld [vmem:[%s917] sm:$0xf]
        %v919 = vld [vmem:[%s917 + $0x4] sm:$0xf]
        %v920 = vld [vmem:[%s917 + $0x8] sm:$0xf]
        %v921 = vld [vmem:[%s917 + $0xc] sm:$0xf]
        %v922 = vld [vmem:[%s917 + $0x10] sm:$0xf]
        %v923 = vld [vmem:[%s917 + $0x14] sm:$0xf]
        %v924 = vld [vmem:[%s917 + $0x18] sm:$0xf]
        %v925 = vld [vmem:[%s917 + $0x1c] sm:$0xf]
        %v926 = vld [vmem:[%s917 + $0x20] sm:$0xf]
        %v927 = vld [vmem:[%s917 + $0x24] sm:$0xf]
        %v928 = vld [vmem:[%s917 + $0x28] sm:$0xf]
        %v929 = vld [vmem:[%s917 + $0x2c] sm:$0xf]
        %v930 = vld [vmem:[%s917 + $0x30] sm:$0xf]
        %v931 = vld [vmem:[%s917 + $0x34] sm:$0xf]
        %v932 = vld [vmem:[%s917 + $0x38] sm:$0xf]
        %v933 = vld [vmem:[%s917 + $0x3c] sm:$0xf]
        %vm935 = vcmask 1046528
        %v936 = vrot.slane %v597, 1
        %v937 = vrot.slane %v598, 1
        %v938 = vsel %vm935, %v936, %v937
        %v939 = vrot.slane %v599, 1
        %v940 = vsel %vm935, %v937, %v939
        %v941 = vrot.slane %v600, 1
        %v942 = vsel %vm935, %v939, %v941
        %v943 = vrot.slane %v601, 1
        %v944 = vsel %vm935, %v941, %v943
        %v945 = vrot.slane %v602, 1
        %v946 = vsel %vm935, %v943, %v945
        %v947 = vrot.slane %v603, 1
        %v948 = vsel %vm935, %v945, %v947
        %v949 = vrot.slane %v604, 1
        %v950 = vsel %vm935, %v947, %v949
        %v951 = vrot.slane 0, 1
        %v952 = vsel %vm935, %v949, %v951
        %v977 = vunpack.c.l.b16 %v918
        %v978 = vunpack.c.l.b16 %v919
        %v979 = vunpack.c.l.b16 %v920
        %v980 = vunpack.c.l.b16 %v921
        %v981 = vunpack.c.l.b16 %v922
        %v982 = vunpack.c.l.b16 %v923
        %v983 = vunpack.c.l.b16 %v924
        %v984 = vunpack.c.l.b16 %v925
        %v985 = vunpack.c.l.b16 %v926
        %v986 = vunpack.c.l.b16 %v927
        %v987 = vunpack.c.l.b16 %v928
        %v988 = vunpack.c.l.b16 %v929
        %v989 = vunpack.c.l.b16 %v930
        %v990 = vunpack.c.l.b16 %v931
        %v991 = vunpack.c.l.b16 %v932
        %v992 = vunpack.c.l.b16 %v933
        %v993 = vpack.c.b16 %v978, %v977
        %v994 = vpack.c.b16 %v980, %v979
        %v995 = vpack.c.b16 %v982, %v981
        %v996 = vpack.c.b16 %v984, %v983
        %v997 = vpack.c.b16 %v986, %v985
        %v998 = vpack.c.b16 %v988, %v987
        %v999 = vpack.c.b16 %v990, %v989
        %v1000 = vpack.c.b16 %v992, %v991
        %1009 = vmatpush.bf16.msra.mxu0 %v1000
        %1010 = vmatpush.bf16.msra.mxu0 %v999
        %1011 = vmatpush.bf16.msra.mxu0 %v998
        %1012 = vmatpush.bf16.msra.mxu0 %v997
        %1013 = vmatpush.bf16.msra.mxu0 %v996
        %1014 = vmatpush.bf16.msra.mxu0 %v995
        %1015 = vmatpush.bf16.msra.mxu0 %v994
        %1016 = vmatpush.bf16.msra.mxu0 %v993
        %1017 = vmatmul.bf16.gmra.mxu0 %v938
        %v1018 = vpop.f32.mrf.mxu0
        %v1019 = vadd.f32 0.0, %v1018
        %v1020 = vpop.f32.mrf.mxu0
        %v1021 = vadd.f32 0.0, %v1020
        %1022 = vmatmul.bf16.gmra.mxu0 %v940
        %v1023 = vpop.f32.mrf.mxu0
        %v1024 = vadd.f32 0.0, %v1023
        %v1025 = vpop.f32.mrf.mxu0
        %v1026 = vadd.f32 0.0, %v1025
        %1027 = vmatmul.bf16.gmra.mxu0 %v942
        %v1028 = vpop.f32.mrf.mxu0
        %v1029 = vadd.f32 0.0, %v1028
        %v1030 = vpop.f32.mrf.mxu0
        %v1031 = vadd.f32 0.0, %v1030
        %1032 = vmatmul.bf16.gmra.mxu0 %v944
        %v1033 = vpop.f32.mrf.mxu0
        %v1034 = vadd.f32 0.0, %v1033
        %v1035 = vpop.f32.mrf.mxu0
        %v1036 = vadd.f32 0.0, %v1035
        %1037 = vmatmul.bf16.gmra.mxu0 %v946
        %v1038 = vpop.f32.mrf.mxu0
        %v1039 = vadd.f32 0.0, %v1038
        %v1040 = vpop.f32.mrf.mxu0
        %v1041 = vadd.f32 0.0, %v1040
        %1042 = vmatmul.bf16.gmra.mxu0 %v948
        %v1043 = vpop.f32.mrf.mxu0
        %v1044 = vadd.f32 0.0, %v1043
        %v1045 = vpop.f32.mrf.mxu0
        %v1046 = vadd.f32 0.0, %v1045
        %1047 = vmatmul.bf16.gmra.mxu0 %v950
        %v1048 = vpop.f32.mrf.mxu0
        %v1049 = vadd.f32 0.0, %v1048
        %v1050 = vpop.f32.mrf.mxu0
        %v1051 = vadd.f32 0.0, %v1050
        %1052 = vmatmul.bf16.gmra.mxu0 %v952
        %v1053 = vpop.f32.mrf.mxu0
        %v1054 = vadd.f32 0.0, %v1053
        %v1055 = vpop.f32.mrf.mxu0
        %v1056 = vadd.f32 0.0, %v1055
        %1057 = vdwg.mxu0
        %v1058 = vadd.f32 %v878, %v1019
        %v1059 = vadd.f32 %v880, %v1021
        %v1060 = vadd.f32 %v883, %v1024
        %v1061 = vadd.f32 %v885, %v1026
        %v1062 = vadd.f32 %v888, %v1029
        %v1063 = vadd.f32 %v890, %v1031
        %v1064 = vadd.f32 %v893, %v1034
        %v1065 = vadd.f32 %v895, %v1036
        %v1066 = vadd.f32 %v898, %v1039
        %v1067 = vadd.f32 %v900, %v1041
        %v1068 = vadd.f32 %v903, %v1044
        %v1069 = vadd.f32 %v905, %v1046
        %v1070 = vadd.f32 %v908, %v1049
        %v1071 = vadd.f32 %v910, %v1051
        %v1072 = vadd.f32 %v913, %v1054
        %v1073 = vadd.f32 %v915, %v1056
        %s1074 = scalar_lea.vmem %s2, 192
        %v1075 = vld [vmem:[%s1074] sm:$0xf]
        %v1076 = vld [vmem:[%s1074 + $0x4] sm:$0xf]
        %v1077 = vld [vmem:[%s1074 + $0x8] sm:$0xf]
        %v1078 = vld [vmem:[%s1074 + $0xc] sm:$0xf]
        %v1079 = vld [vmem:[%s1074 + $0x10] sm:$0xf]
        %v1080 = vld [vmem:[%s1074 + $0x14] sm:$0xf]
        %v1081 = vld [vmem:[%s1074 + $0x18] sm:$0xf]
        %v1082 = vld [vmem:[%s1074 + $0x1c] sm:$0xf]
        %v1083 = vld [vmem:[%s1074 + $0x20] sm:$0xf]
        %v1084 = vld [vmem:[%s1074 + $0x24] sm:$0xf]
        %v1085 = vld [vmem:[%s1074 + $0x28] sm:$0xf]
        %v1086 = vld [vmem:[%s1074 + $0x2c] sm:$0xf]
        %v1087 = vld [vmem:[%s1074 + $0x30] sm:$0xf]
        %v1088 = vld [vmem:[%s1074 + $0x34] sm:$0xf]
        %v1089 = vld [vmem:[%s1074 + $0x38] sm:$0xf]
        %v1090 = vld [vmem:[%s1074 + $0x3c] sm:$0xf]
        %vm1091 = vsmask.f32 6400
        %v1092 = vrot.slane %v648, 1
        %v1093 = vrot.slane %v650, 2
        %v1094 = vor.u32 %v1092, %v1093
        %v1095 = vrot.slane %v659, 1
        %v1096 = vrot.slane %v655, 2
        %v1097 = vor.u32 %v1095, %v1096
        %v1098 = vsel %vm1091, %v1094, %v1097
        %v1099 = vrot.slane %v667, 1
        %v1100 = vrot.slane %v663, 2
        %v1101 = vor.u32 %v1099, %v1100
        %v1102 = vsel %vm1091, %v1097, %v1101
        %v1103 = vrot.slane %v675, 1
        %v1104 = vrot.slane %v671, 2
        %v1105 = vor.u32 %v1103, %v1104
        %v1106 = vsel %vm1091, %v1101, %v1105
        %v1107 = vrot.slane %v683, 1
        %v1108 = vrot.slane %v679, 2
        %v1109 = vor.u32 %v1107, %v1108
        %v1110 = vsel %vm1091, %v1105, %v1109
        %v1111 = vrot.slane %v691, 1
        %v1112 = vrot.slane %v687, 2
        %v1113 = vor.u32 %v1111, %v1112
        %v1114 = vsel %vm1091, %v1109, %v1113
        %v1115 = vrot.slane %v699, 1
        %v1116 = vrot.slane %v695, 2
        %v1117 = vor.u32 %v1115, %v1116
        %v1118 = vsel %vm1091, %v1113, %v1117
        %v1119 = vrot.slane %v707, 1
        %v1120 = vrot.slane %v703, 2
        %v1121 = vor.u32 %v1119, %v1120
        %v1122 = vsel %vm1091, %v1117, %v1121
        %v1123 = vshrl.u32 0, 16
        %v1125 = vrot.slane %v1123, 1
        %v1126 = vrot.slane %v711, 2
        %v1127 = vor.u32 %v1125, %v1126
        %v1128 = vsel %vm1091, %v1121, %v1127
        %v1153 = vunpack.c.l.b16 %v1075
        %v1154 = vunpack.c.l.b16 %v1076
        %v1155 = vunpack.c.l.b16 %v1077
        %v1156 = vunpack.c.l.b16 %v1078
        %v1157 = vunpack.c.l.b16 %v1079
        %v1158 = vunpack.c.l.b16 %v1080
        %v1159 = vunpack.c.l.b16 %v1081
        %v1160 = vunpack.c.l.b16 %v1082
        %v1161 = vunpack.c.l.b16 %v1083
        %v1162 = vunpack.c.l.b16 %v1084
        %v1163 = vunpack.c.l.b16 %v1085
        %v1164 = vunpack.c.l.b16 %v1086
        %v1165 = vunpack.c.l.b16 %v1087
        %v1166 = vunpack.c.l.b16 %v1088
        %v1167 = vunpack.c.l.b16 %v1089
        %v1168 = vunpack.c.l.b16 %v1090
        %v1169 = vpack.c.b16 %v1154, %v1153
        %v1170 = vpack.c.b16 %v1156, %v1155
        %v1171 = vpack.c.b16 %v1158, %v1157
        %v1172 = vpack.c.b16 %v1160, %v1159
        %v1173 = vpack.c.b16 %v1162, %v1161
        %v1174 = vpack.c.b16 %v1164, %v1163
        %v1175 = vpack.c.b16 %v1166, %v1165
        %v1176 = vpack.c.b16 %v1168, %v1167
        %1185 = vmatpush.bf16.msra.mxu0 %v1176
        %1186 = vmatpush.bf16.msra.mxu0 %v1175
        %1187 = vmatpush.bf16.msra.mxu0 %v1174
        %1188 = vmatpush.bf16.msra.mxu0 %v1173
        %1189 = vmatpush.bf16.msra.mxu0 %v1172
        %1190 = vmatpush.bf16.msra.mxu0 %v1171
        %1191 = vmatpush.bf16.msra.mxu0 %v1170
        %1192 = vmatpush.bf16.msra.mxu0 %v1169
        %1193 = vmatmul.bf16.gmra.mxu0 %v1098
        %v1194 = vpop.f32.mrf.mxu0
        %v1195 = vadd.f32 0.0, %v1194
        %v1196 = vpop.f32.mrf.mxu0
        %v1197 = vadd.f32 0.0, %v1196
        %1198 = vmatmul.bf16.gmra.mxu0 %v1102
        %v1199 = vpop.f32.mrf.mxu0
        %v1200 = vadd.f32 0.0, %v1199
        %v1201 = vpop.f32.mrf.mxu0
        %v1202 = vadd.f32 0.0, %v1201
        %1203 = vmatmul.bf16.gmra.mxu0 %v1106
        %v1204 = vpop.f32.mrf.mxu0
        %v1205 = vadd.f32 0.0, %v1204
        %v1206 = vpop.f32.mrf.mxu0
        %v1207 = vadd.f32 0.0, %v1206
        %1208 = vmatmul.bf16.gmra.mxu0 %v1110
        %v1209 = vpop.f32.mrf.mxu0
        %v1210 = vadd.f32 0.0, %v1209
        %v1211 = vpop.f32.mrf.mxu0
        %v1212 = vadd.f32 0.0, %v1211
        %1213 = vmatmul.bf16.gmra.mxu0 %v1114
        %v1214 = vpop.f32.mrf.mxu0
        %v1215 = vadd.f32 0.0, %v1214
        %v1216 = vpop.f32.mrf.mxu0
        %v1217 = vadd.f32 0.0, %v1216
        %1218 = vmatmul.bf16.gmra.mxu0 %v1118
        %v1219 = vpop.f32.mrf.mxu0
        %v1220 = vadd.f32 0.0, %v1219
        %v1221 = vpop.f32.mrf.mxu0
        %v1222 = vadd.f32 0.0, %v1221
        %1223 = vmatmul.bf16.gmra.mxu0 %v1122
        %v1224 = vpop.f32.mrf.mxu0
        %v1225 = vadd.f32 0.0, %v1224
        %v1226 = vpop.f32.mrf.mxu0
        %v1227 = vadd.f32 0.0, %v1226
        %1228 = vmatmul.bf16.gmra.mxu0 %v1128
        %v1229 = vpop.f32.mrf.mxu0
        %v1230 = vadd.f32 0.0, %v1229
        %v1231 = vpop.f32.mrf.mxu0
        %v1232 = vadd.f32 0.0, %v1231
        %1233 = vdwg.mxu0
        %v1234 = vadd.f32 %v1058, %v1195
        %v1235 = vadd.f32 %v1059, %v1197
        %v1236 = vadd.f32 %v1060, %v1200
        %v1237 = vadd.f32 %v1061, %v1202
        %v1238 = vadd.f32 %v1062, %v1205
        %v1239 = vadd.f32 %v1063, %v1207
        %v1240 = vadd.f32 %v1064, %v1210
        %v1241 = vadd.f32 %v1065, %v1212
        %v1242 = vadd.f32 %v1066, %v1215
        %v1243 = vadd.f32 %v1067, %v1217
        %v1244 = vadd.f32 %v1068, %v1220
        %v1245 = vadd.f32 %v1069, %v1222
        %v1246 = vadd.f32 %v1070, %v1225
        %v1247 = vadd.f32 %v1071, %v1227
        %v1248 = vadd.f32 %v1072, %v1230
        %v1249 = vadd.f32 %v1073, %v1232
        %v1250 = vld [vmem:[%s3] sm:$0x1]
        %v1252 = vperm.slane %v1250, 0
        %v1254 = vadd.f32 %v1234, %v1252
        %v1255 = vadd.f32 %v1235, %v1252
        %v1256 = vadd.f32 %v1236, %v1252
        %v1257 = vadd.f32 %v1237, %v1252
        %v1258 = vadd.f32 %v1238, %v1252
        %v1259 = vadd.f32 %v1239, %v1252
        %v1260 = vadd.f32 %v1240, %v1252
        %v1261 = vadd.f32 %v1241, %v1252
        %v1262 = vadd.f32 %v1242, %v1252
        %v1263 = vadd.f32 %v1243, %v1252
        %v1264 = vadd.f32 %v1244, %v1252
        %v1265 = vadd.f32 %v1245, %v1252
        %v1266 = vadd.f32 %v1246, %v1252
        %v1267 = vadd.f32 %v1247, %v1252
        %v1268 = vadd.f32 %v1248, %v1252
        %v1269 = vadd.f32 %v1249, %v1252
        %v1270 = vmax.f32 %v1254, 0.0
        %v1271 = vmax.f32 %v1255, 0.0
        %v1272 = vmax.f32 %v1256, 0.0
        %v1273 = vmax.f32 %v1257, 0.0
        %v1274 = vmax.f32 %v1258, 0.0
        %v1275 = vmax.f32 %v1259, 0.0
        %v1276 = vmax.f32 %v1260, 0.0
        %v1277 = vmax.f32 %v1261, 0.0
        %v1278 = vmax.f32 %v1262, 0.0
        %v1279 = vmax.f32 %v1263, 0.0
        %v1280 = vmax.f32 %v1264, 0.0
        %v1281 = vmax.f32 %v1265, 0.0
        %v1282 = vmax.f32 %v1266, 0.0
        %v1283 = vmax.f32 %v1267, 0.0
        %v1284 = vmax.f32 %v1268, 0.0
        %v1285 = vmax.f32 %v1269, 0.0
        %v1286 = vld [vmem:[%s4] sm:$0x1]
        %vm1287 = vcmp.gt.s32.totalorder %v1286, 0
        %v1288 = vsub.s32 12, %v1286
        %v1289 = vadd.s32 %v1288, 1
        %v1290 = vsel %vm1287, %v1289, 0
        %v1291 = vlaneseq
        %v1292 = vshrl.u32 %v1291, 7
        %v1293 = vadd.s32 %v1292, 8
        %v1294 = vperm.slane %v1290, 0
        %vm1295 = vcmp.lt.s32.totalorder %v1292, %v1294
        %vm1296 = vcmp.lt.s32.totalorder %v1293, %v1294
        %v1297 = vsel %vm1295, %v1270, 0.0
        %v1298 = vsel %vm1296, %v1271, 0.0
        %v1299 = vsel %vm1295, %v1272, 0.0
        %v1300 = vsel %vm1296, %v1273, 0.0
        %v1301 = vsel %vm1295, %v1274, 0.0
        %v1302 = vsel %vm1296, %v1275, 0.0
        %v1303 = vsel %vm1295, %v1276, 0.0
        %v1304 = vsel %vm1296, %v1277, 0.0
        %v1305 = vsel %vm1295, %v1278, 0.0
        %v1306 = vsel %vm1296, %v1279, 0.0
        %v1307 = vsel %vm1295, %v1280, 0.0
        %v1308 = vsel %vm1296, %v1281, 0.0
        %v1309 = vsel %vm1295, %v1282, 0.0
        %v1310 = vsel %vm1296, %v1283, 0.0
        %v1311 = vsel %vm1295, %v1284, 0.0
        %v1312 = vsel %vm1296, %v1285, 0.0
        %v1313 = vmax.f32 %v1297, %v1298
        %v1314 = vrot.slane %v1313, 4
        %v1315 = vmax.f32 %v1313, %v1314
        %v1316 = vrot.slane %v1315, 2
        %v1317 = vmax.f32 %v1315, %v1316
        %v1318 = vrot.slane %v1317, 1
        %v1319 = vmax.f32 %v1317, %v1318
        %v1320 = vmax.f32 %v1299, %v1300
        %v1321 = vrot.slane %v1320, 4
        %v1322 = vmax.f32 %v1320, %v1321
        %v1323 = vrot.slane %v1322, 2
        %v1324 = vmax.f32 %v1322, %v1323
        %v1325 = vrot.slane %v1324, 1
        %v1326 = vmax.f32 %v1324, %v1325
        %v1327 = vmax.f32 %v1301, %v1302
        %v1328 = vrot.slane %v1327, 4
        %v1329 = vmax.f32 %v1327, %v1328
        %v1330 = vrot.slane %v1329, 2
        %v1331 = vmax.f32 %v1329, %v1330
        %v1332 = vrot.slane %v1331, 1
        %v1333 = vmax.f32 %v1331, %v1332
        %v1334 = vmax.f32 %v1303, %v1304
        %v1335 = vrot.slane %v1334, 4
        %v1336 = vmax.f32 %v1334, %v1335
        %v1337 = vrot.slane %v1336, 2
        %v1338 = vmax.f32 %v1336, %v1337
        %v1339 = vrot.slane %v1338, 1
        %v1340 = vmax.f32 %v1338, %v1339
        %v1341 = vmax.f32 %v1305, %v1306
        %v1342 = vrot.slane %v1341, 4
        %v1343 = vmax.f32 %v1341, %v1342
        %v1344 = vrot.slane %v1343, 2
        %v1345 = vmax.f32 %v1343, %v1344
        %v1346 = vrot.slane %v1345, 1
        %v1347 = vmax.f32 %v1345, %v1346
        %v1348 = vmax.f32 %v1307, %v1308
        %v1349 = vrot.slane %v1348, 4
        %v1350 = vmax.f32 %v1348, %v1349
        %v1351 = vrot.slane %v1350, 2
        %v1352 = vmax.f32 %v1350, %v1351
        %v1353 = vrot.slane %v1352, 1
        %v1354 = vmax.f32 %v1352, %v1353
        %v1355 = vmax.f32 %v1309, %v1310
        %v1356 = vrot.slane %v1355, 4
        %v1357 = vmax.f32 %v1355, %v1356
        %v1358 = vrot.slane %v1357, 2
        %v1359 = vmax.f32 %v1357, %v1358
        %v1360 = vrot.slane %v1359, 1
        %v1361 = vmax.f32 %v1359, %v1360
        %v1362 = vmax.f32 %v1311, %v1312
        %v1363 = vrot.slane %v1362, 4
        %v1364 = vmax.f32 %v1362, %v1363
        %v1365 = vrot.slane %v1364, 2
        %v1366 = vmax.f32 %v1364, %v1365
        %v1367 = vrot.slane %v1366, 1
        %v1368 = vmax.f32 %v1366, %v1367
        %v1369 = vpack.c.bf16 %v1319, %v1319
        %v1370 = vpack.c.bf16 %v1326, %v1326
        %v1371 = vpack.c.bf16 %v1333, %v1333
        %v1372 = vpack.c.bf16 %v1340, %v1340
        %v1373 = vpack.c.bf16 %v1347, %v1347
        %v1374 = vpack.c.bf16 %v1354, %v1354
        %v1375 = vpack.c.bf16 %v1361, %v1361
        %v1376 = vpack.c.bf16 %v1368, %v1368
        %v1377 = vld [vmem:[#allocation5] sm:$0xf]
        %v1378 = vld [vmem:[#allocation5 + $0x4] sm:$0xf]
        %v1379 = vld [vmem:[#allocation5 + $0x8] sm:$0xf]
        %v1380 = vld [vmem:[#allocation5 + $0xc] sm:$0xf]
        %v1381 = vld [vmem:[#allocation5 + $0x10] sm:$0xf]
        %v1382 = vld [vmem:[#allocation5 + $0x14] sm:$0xf]
        %v1383 = vld [vmem:[#allocation5 + $0x18] sm:$0xf]
        %v1384 = vld [vmem:[#allocation5 + $0x1c] sm:$0xf]
        %v1385 = vld [vmem:[#allocation5 + $0x20] sm:$0xf]
        %v1386 = vld [vmem:[#allocation5 + $0x24] sm:$0xf]
        %v1387 = vld [vmem:[#allocation5 + $0x28] sm:$0xf]
        %v1388 = vld [vmem:[#allocation5 + $0x2c] sm:$0xf]
        %v1389 = vld [vmem:[#allocation5 + $0x30] sm:$0xf]
        %v1390 = vld [vmem:[#allocation5 + $0x34] sm:$0xf]
        %v1391 = vld [vmem:[#allocation5 + $0x38] sm:$0xf]
        %v1392 = vld [vmem:[#allocation5 + $0x3c] sm:$0xf]
        %v1393 = vld [vmem:[%s6] sm:$0x1]
        %v1395 = vperm.slane %v1393, 0
        %v1405 = vunpack.c.l.b16 %v1369
        %v1406 = vunpack.c.l.b16 %v1370
        %v1407 = vunpack.c.l.b16 %v1371
        %v1408 = vunpack.c.l.b16 %v1372
        %v1409 = vunpack.c.l.b16 %v1373
        %v1410 = vunpack.c.l.b16 %v1374
        %v1411 = vunpack.c.l.b16 %v1375
        %v1412 = vunpack.c.l.b16 %v1376
        %vm1413 = vcmask 1041409
        %v1414 = vsel %vm1413, %v1406, %v1405
        %vm1415 = vcmask 1042434
        %v1416 = vsel %vm1415, %v1407, %v1414
        %vm1417 = vcmask 1043459
        %v1418 = vsel %vm1417, %v1408, %v1416
        %vm1419 = vcmask 1044484
        %v1420 = vsel %vm1419, %v1409, %v1418
        %vm1421 = vcmask 1045509
        %v1422 = vsel %vm1421, %v1410, %v1420
        %vm1423 = vcmask 1046534
        %v1424 = vsel %vm1423, %v1411, %v1422
        %vm1425 = vcmask 1047559
        %v1426 = vsel %vm1425, %v1412, %v1424
        %v1427 = vpack.c.b16 %v1426, %v1426
        %v1445 = vunpack.c.l.b16 %v1377
        %v1446 = vunpack.c.l.b16 %v1378
        %v1447 = vunpack.c.l.b16 %v1379
        %v1448 = vunpack.c.l.b16 %v1380
        %v1449 = vunpack.c.l.b16 %v1381
        %v1450 = vunpack.c.l.b16 %v1382
        %v1451 = vunpack.c.l.b16 %v1383
        %v1452 = vunpack.c.l.b16 %v1384
        %v1453 = vunpack.c.l.b16 %v1385
        %v1454 = vunpack.c.l.b16 %v1386
        %v1455 = vunpack.c.l.b16 %v1387
        %v1456 = vunpack.c.l.b16 %v1388
        %v1457 = vunpack.c.l.b16 %v1389
        %v1458 = vunpack.c.l.b16 %v1390
        %v1459 = vunpack.c.l.b16 %v1391
        %v1460 = vunpack.c.l.b16 %v1392
        %v1461 = vpack.c.b16 %v1446, %v1445
        %v1462 = vpack.c.b16 %v1448, %v1447
        %v1463 = vpack.c.b16 %v1450, %v1449
        %v1464 = vpack.c.b16 %v1452, %v1451
        %v1465 = vpack.c.b16 %v1454, %v1453
        %v1466 = vpack.c.b16 %v1456, %v1455
        %v1467 = vpack.c.b16 %v1458, %v1457
        %v1468 = vpack.c.b16 %v1460, %v1459
        %1477 = vmatpush.bf16.msra.mxu0 %v1468
        %1478 = vmatpush.bf16.msra.mxu0 %v1467
        %1479 = vmatpush.bf16.msra.mxu0 %v1466
        %1480 = vmatpush.bf16.msra.mxu0 %v1465
        %1481 = vmatpush.bf16.msra.mxu0 %v1464
        %1482 = vmatpush.bf16.msra.mxu0 %v1463
        %1483 = vmatpush.bf16.msra.mxu0 %v1462
        %1484 = vmatpush.bf16.msra.mxu0 %v1461
        %1485 = vmatmul.bf16.gmra.mxu0 %v1427
        %v1486 = vpop.f32.mrf.mxu0
        %v1487 = vadd.f32 %v1395, %v1486
        %v1488 = vpop.f32.mrf.mxu0
        %1489 = vdwg.mxu0
        %vm1490 = vcmp.lt.s32.totalorder %v315, 19
        %v1491 = vsel %vm1490, %v1487, -1e+30
        %1492 = vmax.xlane.f32.xlu0 %v1491
        %v1493 = vpop.xlane.xlu0 %1492
        %v1494 = vsub.f32 %v1491, %v1493
        %v1495 = vmul.f32 %v1494, 1.442695
        %v1496 = vpow.pop %v1495
        %1497 = vadd.xlane.f32.xlu0 %v1496
        %v1498 = vpop.xlane.xlu0 %1497
        %v1499 = vlog2.pop %v1498
        %v1500 = vmul.f32 %v1499, 0.6931472
        %v1501 = vsub.f32 %v1494, %v1500
        %1502 = vst [vmem:[%s306] sm:$0xff] %v1501
        %s1503 = sand.u32 %s183, 1
        %s1504 = scalar_lea.sflag [#allocation4], %s1503
        %s1505 = sand.u32 %s183, 1
        %s1506 = smul.addr %s1505, 8
        %s1507 = scalar_lea.vmem [#allocation7], %s1506
        // Predicated region
        $region57: #{_textcnn_jit.1} parent=47 // pred_check
          %p1508 = pneg %p193
        $region58: #{_textcnn_jit.1} parent=47 // pred_check_branch
          %1510 = sbr.rel (%p1508) target = $region60
        $region59: #{_textcnn_jit.1} parent=47 // pred_region
          %1512 = vsyncadd %s1504, 0
          %s1513 = smul.addr %s23, 8
          %s1514 = scalar_lea.hbm %s7, %s1513
          %s1516 = sshll.u32 %s1507, 4
          %s1517 = int_to_ptr.vmem [resolvable:$true] %s1516
          %s1518 = sshll.u32 %s1514, 4
          %s1519 = int_to_ptr.hbm [resolvable:$true] %s1518
          %1521 = dma.vmem_to_hbm [thread:$0]  %s1517, 128, %s1519, %s1504
        $region60: #{_textcnn_jit.1} parent=47 // pred_fallthru
          _
      $region48: #{_textcnn_jit.1} parent=5 // pred_fallthru
        _
      %p1522 = scmp.le.s32.totalorder 2, %s18
      // Predicated region
      $region61: #{_textcnn_jit.1} parent=5 // pred_check
        %p1523 = pneg %p1522
      $region62: #{_textcnn_jit.1} parent=5 // pred_check_branch
        %1525 = sbr.rel (%p1523) target = $region64
      $region63: #{_textcnn_jit.1} parent=5 // pred_region
        %s1526 = ssub.s32 %s18, 2
        // Predicated region
        $region65: #{_textcnn_jit.1} parent=63 // pred_check
          %p1527 = pneg %p199
        $region66: #{_textcnn_jit.1} parent=63 // pred_check_branch
          %1529 = sbr.rel (%p1527) target = $region68
        $region67: #{_textcnn_jit.1} parent=63 // pred_region
          %s1530 = sand.u32 %s184, 1
          %s1531 = scalar_lea.sflag [#allocation4], %s1530
          %s1532 = sand.u32 %s184, 1
          %s1533 = smul.addr %s1532, 8
          %s1534 = scalar_lea.vmem [#allocation7], %s1533
          %1536 = dma.done %s1531, 128
        $region68: #{_textcnn_jit.1} parent=63 // pred_fallthru
          _
      $region64: #{_textcnn_jit.1} parent=5 // pred_fallthru
        _
    $region6: #{_textcnn_jit.1} parent=1 // loop_footer
      %s22 = sadd.s32 1, %s18
    $region7: #{_textcnn_jit.1} parent=1 // loop_footer_branch
      %17 = sbr.rel target = $region3
    $region8: #{_textcnn_jit.1} parent=1 // loop_exit
      _
    %1537 = vsyncpa [#allocation3], 1
    %s1538 = scalar_lea.sflag [#allocation3], 1
    %1539 = vsyncpa %s1538, 1
    %1540 = vsyncpa [#allocation6], 1
    %1541 = vsyncpa [#allocation4], 1
    %s1542 = scalar_lea.sflag [#allocation4], 1
    %1543 = vsyncpa %s1542, 1

</llo_original>
